<compile_context>
chip_gen: v5e
topology: v5e:2x2
jax: 0.10.0
libtpu: 0.0.40
codegen_flags: <defaults>
</compile_context>

<pallas_src>
import math
import jax
import jax.numpy as jnp
from jax.experimental import pallas as pl
from jax.experimental.pallas import tpu as pltpu

# ---------------- small synthetic BERT config ----------------
VOCAB = 100
TYPE_VOCAB = 2
MAX_POS = 16
HIDDEN = 32
NUM_HEADS = 2
HEAD_DIM = HIDDEN // NUM_HEADS
INTER = 64
NUM_LAYERS = 2
NUM_LABELS = 3
LN_EPS = 1e-12

EMB_ROWS = VOCAB + MAX_POS + TYPE_VOCAB      # 118
EMB_ROWS_PAD = 128                           # lane-aligned one-hot width

# ---- per-layer packed vector slab row layout (L, VEC_ROWS, 128) ----
# rows 3*h + {0,1,2} : q/k/v bias for head h (lanes :HEAD_DIM)
R_BO   = 3 * NUM_HEADS        # attention output bias      (lanes :HIDDEN)
R_LN1G = R_BO + 1             # post-attention LN gamma
R_LN1B = R_BO + 2             # post-attention LN beta
R_BI   = R_BO + 3             # FFN intermediate bias      (lanes :INTER)
R_BD   = R_BO + 4             # FFN output bias
R_LN2G = R_BO + 5             # post-FFN LN gamma
R_LN2B = R_BO + 6             # post-FFN LN beta
VEC_ROWS = R_BO + 7           # 13

# ---- misc packed vector slab rows (4, 128) ----
M_EMB_LNG, M_EMB_LNB, M_POOL_B, M_FC_B = 0, 1, 2, 3


# ---------------- in-kernel helpers ----------------
def _layer_norm(x, gamma, beta):
    mean = jnp.mean(x, axis=-1, keepdims=True)
    var = jnp.mean(jnp.square(x - mean), axis=-1, keepdims=True)
    return (x - mean) * jax.lax.rsqrt(var + LN_EPS) * gamma + beta


# ---------------- fused forward kernel ----------------
def _fused_bert_kernel(ids_ref, mask_ref, emb_ref, wqkv_ref, wo_ref, wi_ref, wd_ref,
                       vecs_ref, misc_ref, headw_ref, o_ref):
    B, S = mask_ref.shape
    BS = B * S
    H = emb_ref.shape[1]
    nrows = emb_ref.shape[0]
    bf16, f32 = jnp.bfloat16, jnp.float32
    scale = 1.0 / math.sqrt(HEAD_DIM)

    # ---- fused word+pos+type embedding gather: one one-hot matmul (indices disjoint per row)
    col = jax.lax.broadcasted_iota(jnp.int32, (BS, nrows), 1)
    ids = ids_ref[...]                                                  # (BS, 3) int32
    hit = (col == ids[:, 0:1]) | (col == ids[:, 1:2]) | (col == ids[:, 2:3])
    onehot = jnp.where(hit, 1.0, 0.0).astype(bf16)                      # (BS, 128)
    x = jnp.dot(onehot, emb_ref[...], preferred_element_type=f32)       # (BS, H) f32

    x = _layer_norm(x, misc_ref[M_EMB_LNG:M_EMB_LNG + 1, :H],
                    misc_ref[M_EMB_LNB:M_EMB_LNB + 1, :H])

    # additive attention mask (f32), broadcast once, hoisted out of the layer/head loops
    amask = jnp.broadcast_to(((1.0 - mask_ref[...]) * -10000.0)[:, None, :], (B, S, S))

    for l in range(NUM_LAYERS):                                         # static unroll
        xb = x.astype(bf16)

        # ---- multi-head self-attention (per-head weights pre-split at init: no lane
        #      slicing / no lane concat; output projection folded as sum over heads)
        attn = jnp.zeros((BS, H), f32)
        for h in range(NUM_HEADS):                                      # static unroll
            def proj(j, _l=l, _h=h):
                y = (jnp.dot(xb, wqkv_ref[_l, _h, j], preferred_element_type=f32)
                     + vecs_ref[_l, 3 * _h + j:3 * _h + j + 1, :HEAD_DIM])
                return y.reshape(B, S, HEAD_DIM).astype(bf16)
            q, k, v = proj(0), proj(1), proj(2)

            s = jnp.einsum('bqd,bkd->bqk', q, k,
                           preferred_element_type=f32) * scale + amask  # (B,S,S) f32
            s = s - jnp.max(s, axis=-1, keepdims=True)
            e = jnp.exp(s)
            p = (e * pl.reciprocal(jnp.sum(e, axis=-1, keepdims=True),
                                   approx=True)).astype(bf16)
            ctx = jnp.einsum('bqk,bkd->bqd', p, v, preferred_element_type=f32)
            ctx = ctx.reshape(BS, HEAD_DIM).astype(bf16)
            attn = attn + jnp.dot(ctx, wo_ref[l, h], preferred_element_type=f32)
        attn = attn + vecs_ref[l, R_BO:R_BO + 1, :H]
        x = _layer_norm(x + attn, vecs_ref[l, R_LN1G:R_LN1G + 1, :H],
                        vecs_ref[l, R_LN1B:R_LN1B + 1, :H])

        # ---- feed-forward
        inter = (jnp.dot(x.astype(bf16), wi_ref[l], preferred_element_type=f32)
                 + vecs_ref[l, R_BI:R_BI + 1, :INTER])
        # TODO(synk): HF BERT uses exact (erf) GELU; tanh approximation kept for robust lowering.
        inter = jax.nn.gelu(inter, approximate=True)
        ffn = (jnp.dot(inter.astype(bf16), wd_ref[l], preferred_element_type=f32)
               + vecs_ref[l, R_BD:R_BD + 1, :H])
        x = _layer_norm(x + ffn, vecs_ref[l, R_LN2G:R_LN2G + 1, :H],
                        vecs_ref[l, R_LN2B:R_LN2B + 1, :H])

    # ---- pooler on [CLS] rows -> dropout(p=0.3)=identity (eval) -> fc
    # TODO(synk): dropout treated as identity (inference); training parity would need in-kernel PRNG.
    x_cls = x.reshape(B, S, H)[:, 0, :]                                  # (B, H)
    pooled = jnp.tanh(jnp.dot(x_cls.astype(bf16), headw_ref[0], preferred_element_type=f32)
                      + misc_ref[M_POOL_B:M_POOL_B + 1, :H])
    logits = (jnp.dot(pooled.astype(bf16), headw_ref[1],
                      preferred_element_type=f32)[:, :NUM_LABELS]
              + misc_ref[M_FC_B:M_FC_B + 1, :NUM_LABELS])
    o_ref[...] = logits


# ---------------- deterministic parameter init (packed / stacked) ----------------
def init_params(key):
    ks = iter(jax.random.split(key, 64))

    def w(shape):
        return (0.02 * jax.random.normal(next(ks), shape)).astype(jnp.float32)

    H, HD = HIDDEN, HEAD_DIM
    bf16 = jnp.bfloat16

    # concatenated [word | position | token-type] table, row-padded to 128
    emb = jnp.zeros((EMB_ROWS_PAD, H), jnp.float32)
    emb = emb.at[:VOCAB].set(w((VOCAB, H)))
    emb = emb.at[VOCAB:VOCAB + MAX_POS].set(w((MAX_POS, H)))
    emb = emb.at[VOCAB + MAX_POS:EMB_ROWS].set(w((TYPE_VOCAB, H)))

    w_qkv, w_o, wi, wd, layer_vecs = [], [], [], [], []
    for _ in range(NUM_LAYERS):
        wq, wk, wv, wo = w((H, H)), w((H, H)), w((H, H)), w((H, H))
        # per-head pre-split: (NH, 3, H, HD) and (NH, HD, H)
        w_qkv.append(jnp.stack([jnp.stack([m[:, h * HD:(h + 1) * HD] for m in (wq, wk, wv)])
                                for h in range(NUM_HEADS)]))
        w_o.append(jnp.stack([wo[h * HD:(h + 1) * HD, :] for h in range(NUM_HEADS)]))
        wi.append(w((H, INTER)))
        wd.append(w((INTER, H)))
        # packed per-layer vectors: all biases 0, LN gammas 1, LN betas 0
        vec = jnp.zeros((VEC_ROWS, 128), jnp.float32)
        vec = vec.at[R_LN1G, :H].set(1.0).at[R_LN2G, :H].set(1.0)
        layer_vecs.append(vec)

    misc = jnp.zeros((4, 128), jnp.float32).at[M_EMB_LNG, :H].set(1.0)

    head_w = jnp.zeros((2, H, H), jnp.float32)
    head_w = head_w.at[0].set(w((H, H)))                              # pooler W (in,out)
    head_w = head_w.at[1, :, :NUM_LABELS].set(w((H, NUM_LABELS)))     # fc W, lane-padded

    return {
        "emb_table": emb.astype(bf16),                 # (128, H)
        "w_qkv": jnp.stack(w_qkv).astype(bf16),        # (L, NH, 3, H, HD)
        "w_o": jnp.stack(w_o).astype(bf16),            # (L, NH, HD, H)
        "wi": jnp.stack(wi).astype(bf16),              # (L, H, INTER)
        "wd": jnp.stack(wd).astype(bf16),              # (L, INTER, H)
        "layer_vecs": jnp.stack(layer_vecs),           # (L, 13, 128) f32
        "misc_vecs": misc,                             # (4, 128) f32
        "head_w": head_w.astype(bf16),                 # (2, H, H)
    }


# ---------------- forward pass (CustomBERTModel.forward) ----------------
def custom_bert_forward(params, input_ids, attention_mask, token_type_ids=None, labels=None):
    # TODO(synk): `labels` (HF in-model loss) is ignored; the module returns logits only.
    B, S = input_ids.shape
    if token_type_ids is None:
        token_type_ids = jnp.zeros_like(input_ids)
    pos_ids = jnp.broadcast_to(jnp.arange(S, dtype=jnp.int32)[None, :], (B, S))

    # indices into the concatenated [word | pos | type] table; the kernel turns these into
    # one fused one-hot gather matmul (no (B,S,H) embedding materialization in HBM)
    gather_ids = jnp.stack(
        [input_ids.astype(jnp.int32).reshape(-1),
         (VOCAB + pos_ids).reshape(-1),
         (VOCAB + MAX_POS + token_type_ids.astype(jnp.int32)).reshape(-1)],
        axis=1)                                                        # (B*S, 3) int32
    mask_f = attention_mask.astype(jnp.float32)                        # (B, S)

    operands = (gather_ids, mask_f, params["emb_table"], params["w_qkv"], params["w_o"],
                params["wi"], params["wd"], params["layer_vecs"], params["misc_vecs"],
                params["head_w"])

    logits = pl.pallas_call(
        _fused_bert_kernel,
        out_shape=jax.ShapeDtypeStruct((B, NUM_LABELS), jnp.float32),
        in_specs=[pl.BlockSpec(memory_space=pltpu.MemorySpace.VMEM)] * len(operands),
        out_specs=pl.BlockSpec(memory_space=pltpu.MemorySpace.VMEM),
    )(*operands)
    return logits


if __name__ == "__main__":
    key = jax.random.PRNGKey(0)
    k_param, k_ids = jax.random.split(key)
    params = init_params(k_param)

    B, S = 2, 8
    input_ids = jax.random.randint(k_ids, (B, S), 0, VOCAB, dtype=jnp.int32)
    attention_mask = jnp.array([[1, 1, 1, 1, 1, 1, 1, 1],
                                [1, 1, 1, 1, 1, 0, 0, 0]], dtype=jnp.int32)

    logits = custom_bert_forward(params, input_ids, attention_mask)
    jax.block_until_ready(logits)
    assert logits.shape == (B, NUM_LABELS)
    assert bool(jnp.all(jnp.isfinite(logits)))
    print("KERNEL_OK")
</pallas_src>

<mosaic_0001>
module attributes {stable_mosaic.version = 11 : i64} {
  func.func @_fused_bert_kernel(%arg0: memref<16x3xi32, #tpu.memory_space<vmem>>, %arg1: memref<2x8xf32, #tpu.memory_space<vmem>>, %arg2: memref<128x32xbf16, #tpu.memory_space<vmem>>, %arg3: memref<2x2x3x32x16xbf16, #tpu.memory_space<vmem>>, %arg4: memref<2x2x16x32xbf16, #tpu.memory_space<vmem>>, %arg5: memref<2x32x64xbf16, #tpu.memory_space<vmem>>, %arg6: memref<2x64x32xbf16, #tpu.memory_space<vmem>>, %arg7: memref<2x13x128xf32, #tpu.memory_space<vmem>>, %arg8: memref<4x128xf32, #tpu.memory_space<vmem>>, %arg9: memref<2x32x32xbf16, #tpu.memory_space<vmem>>, %arg10: memref<2x3xf32, #tpu.memory_space<vmem>>) attributes {dimension_semantics = [], scalar_prefetch = 0 : i64, scratch_operands = 0 : i64, tpu.core_type = #tpu.core_type<tc>} {
    %0 = tpu.iota {dimensions = array<i32: 1>} : vector<16x128xi32>
    %c0 = arith.constant 0 : index
    %c0_0 = arith.constant 0 : index
    %1 = vector.load %arg0[%c0, %c0_0] : memref<16x3xi32, #tpu.memory_space<vmem>>, vector<16x3xi32>
    %2 = vector.extract_strided_slice %1 {offsets = [0, 0], sizes = [16, 1], strides = [1, 1]} : vector<16x3xi32> to vector<16x1xi32>
    %3 = vector.broadcast %2 : vector<16x1xi32> to vector<16x128xi32>
    %4 = arith.cmpi eq, %0, %3 : vector<16x128xi32>
    %5 = vector.extract_strided_slice %1 {offsets = [0, 1], sizes = [16, 1], strides = [1, 1]} : vector<16x3xi32> to vector<16x1xi32>
    %6 = vector.broadcast %5 : vector<16x1xi32> to vector<16x128xi32>
    %7 = arith.cmpi eq, %0, %6 : vector<16x128xi32>
    %8 = arith.ori %4, %7 : vector<16x128xi1>
    %9 = vector.extract_strided_slice %1 {offsets = [0, 2], sizes = [16, 1], strides = [1, 1]} : vector<16x3xi32> to vector<16x1xi32>
    %10 = vector.broadcast %9 : vector<16x1xi32> to vector<16x128xi32>
    %11 = arith.cmpi eq, %0, %10 : vector<16x128xi32>
    %12 = arith.ori %8, %11 : vector<16x128xi1>
    %cst = arith.constant 1.000000e+00 : f32
    %cst_1 = arith.constant 0.000000e+00 : f32
    %13 = vector.broadcast %cst : f32 to vector<16x128xf32>
    %14 = vector.broadcast %cst_1 : f32 to vector<16x128xf32>
    %15 = arith.select %12, %13, %14 : vector<16x128xi1>, vector<16x128xf32>
    %16 = arith.truncf %15 : vector<16x128xf32> to vector<16x128xbf16>
    %c0_2 = arith.constant 0 : index
    %c0_3 = arith.constant 0 : index
    %17 = vector.load %arg2[%c0_2, %c0_3] : memref<128x32xbf16, #tpu.memory_space<vmem>>, vector<128x32xbf16>
    %cst_4 = arith.constant dense<0.000000e+00> : vector<16x32xf32>
    %18 = tpu.matmul %16, %17, %cst_4 {dimension_numbers = #tpu.dot_dimension_numbers<[1], [0], [0], [1], [0, 0, 1, 1], [], []>} : vector<16x128xbf16>, vector<128x32xbf16>, vector<16x32xf32> -> vector<16x32xf32>
    %c0_5 = arith.constant 0 : index
    %c0_6 = arith.constant 0 : index
    %19 = vector.load %arg8[%c0_5, %c0_6] : memref<4x128xf32, #tpu.memory_space<vmem>>, vector<1x32xf32>
    %c1 = arith.constant 1 : index
    %c0_7 = arith.constant 0 : index
    %20 = vector.load %arg8[%c1, %c0_7] : memref<4x128xf32, #tpu.memory_space<vmem>>, vector<1x32xf32>
    %cst_8 = arith.constant dense<0.000000e+00> : vector<16xf32>
    %21 = vector.multi_reduction <add>, %18, %cst_8 [1] : vector<16x32xf32> to vector<16xf32>
    %22 = vector.shape_cast %21 : vector<16xf32> to vector<16x1xf32>
    %cst_9 = arith.constant 3.200000e+01 : f32
    %23 = vector.broadcast %cst_9 : f32 to vector<16x1xf32>
    %24 = arith.divf %22, %23 : vector<16x1xf32>
    %25 = vector.broadcast %24 : vector<16x1xf32> to vector<16x32xf32>
    %26 = arith.subf %18, %25 : vector<16x32xf32>
    %27 = arith.mulf %26, %26 : vector<16x32xf32>
    %cst_10 = arith.constant dense<0.000000e+00> : vector<16xf32>
    %28 = vector.multi_reduction <add>, %27, %cst_10 [1] : vector<16x32xf32> to vector<16xf32>
    %29 = vector.shape_cast %28 : vector<16xf32> to vector<16x1xf32>
    %cst_11 = arith.constant 3.200000e+01 : f32
    %30 = vector.broadcast %cst_11 : f32 to vector<16x1xf32>
    %31 = arith.divf %29, %30 : vector<16x1xf32>
    %32 = vector.broadcast %24 : vector<16x1xf32> to vector<16x32xf32>
    %33 = arith.subf %18, %32 : vector<16x32xf32>
    %cst_12 = arith.constant 9.99999996E-13 : f32
    %34 = vector.broadcast %cst_12 : f32 to vector<16x1xf32>
    %35 = arith.addf %31, %34 : vector<16x1xf32>
    %36 = math.rsqrt %35 : vector<16x1xf32>
    %37 = vector.broadcast %36 : vector<16x1xf32> to vector<16x32xf32>
    %38 = arith.mulf %33, %37 : vector<16x32xf32>
    %39 = vector.broadcast %19 : vector<1x32xf32> to vector<16x32xf32>
    %40 = arith.mulf %38, %39 : vector<16x32xf32>
    %41 = vector.broadcast %20 : vector<1x32xf32> to vector<16x32xf32>
    %42 = arith.addf %40, %41 : vector<16x32xf32>
    %c0_13 = arith.constant 0 : index
    %c0_14 = arith.constant 0 : index
    %43 = vector.load %arg1[%c0_13, %c0_14] : memref<2x8xf32, #tpu.memory_space<vmem>>, vector<2x8xf32>
    %cst_15 = arith.constant 1.000000e+00 : f32
    %44 = vector.broadcast %cst_15 : f32 to vector<2x8xf32>
    %45 = arith.subf %44, %43 : vector<2x8xf32>
    %cst_16 = arith.constant -1.000000e+04 : f32
    %46 = vector.broadcast %cst_16 : f32 to vector<2x8xf32>
    %47 = arith.mulf %45, %46 : vector<2x8xf32>
    %48 = vector.shape_cast %47 : vector<2x8xf32> to vector<2x1x8xf32>
    %49 = vector.shape_cast %48 : vector<2x1x8xf32> to vector<2x1x8xf32>
    %50 = vector.broadcast %49 : vector<2x1x8xf32> to vector<2x8x8xf32>
    %51 = arith.truncf %42 : vector<16x32xf32> to vector<16x32xbf16>
    %cst_17 = arith.constant 0.000000e+00 : f32
    %52 = vector.broadcast %cst_17 : f32 to vector<16x32xf32>
    %c0_18 = arith.constant 0 : index
    %c0_19 = arith.constant 0 : index
    %c0_20 = arith.constant 0 : index
    %c0_21 = arith.constant 0 : index
    %c0_22 = arith.constant 0 : index
    %53 = vector.load %arg3[%c0_18, %c0_19, %c0_20, %c0_21, %c0_22] : memref<2x2x3x32x16xbf16, #tpu.memory_space<vmem>>, vector<1x1x1x32x16xbf16>
    %54 = vector.shape_cast %53 : vector<1x1x1x32x16xbf16> to vector<32x16xbf16>
    %cst_23 = arith.constant dense<0.000000e+00> : vector<16x16xf32>
    %55 = tpu.matmul %51, %54, %cst_23 {dimension_numbers = #tpu.dot_dimension_numbers<[1], [0], [0], [1], [0, 0, 1, 1], [], []>} : vector<16x32xbf16>, vector<32x16xbf16>, vector<16x16xf32> -> vector<16x16xf32>
    %c0_24 = arith.constant 0 : index
    %c0_25 = arith.constant 0 : index
    %c0_26 = arith.constant 0 : index
    %56 = vector.load %arg7[%c0_24, %c0_25, %c0_26] : memref<2x13x128xf32, #tpu.memory_space<vmem>>, vector<1x1x16xf32>
    %57 = vector.shape_cast %56 : vector<1x1x16xf32> to vector<1x16xf32>
    %58 = vector.broadcast %57 : vector<1x16xf32> to vector<16x16xf32>
    %59 = arith.addf %55, %58 : vector<16x16xf32>
    %60 = vector.shape_cast %59 : vector<16x16xf32> to vector<2x8x16xf32>
    %61 = arith.truncf %60 : vector<2x8x16xf32> to vector<2x8x16xbf16>
    %c0_27 = arith.constant 0 : index
    %c0_28 = arith.constant 0 : index
    %c1_29 = arith.constant 1 : index
    %c0_30 = arith.constant 0 : index
    %c0_31 = arith.constant 0 : index
    %62 = vector.load %arg3[%c0_27, %c0_28, %c1_29, %c0_30, %c0_31] : memref<2x2x3x32x16xbf16, #tpu.memory_space<vmem>>, vector<1x1x1x32x16xbf16>
    %63 = vector.shape_cast %62 : vector<1x1x1x32x16xbf16> to vector<32x16xbf16>
    %cst_32 = arith.constant dense<0.000000e+00> : vector<16x16xf32>
    %64 = tpu.matmul %51, %63, %cst_32 {dimension_numbers = #tpu.dot_dimension_numbers<[1], [0], [0], [1], [0, 0, 1, 1], [], []>} : vector<16x32xbf16>, vector<32x16xbf16>, vector<16x16xf32> -> vector<16x16xf32>
    %c0_33 = arith.constant 0 : index
    %c1_34 = arith.constant 1 : index
    %c0_35 = arith.constant 0 : index
    %65 = vector.load %arg7[%c0_33, %c1_34, %c0_35] : memref<2x13x128xf32, #tpu.memory_space<vmem>>, vector<1x1x16xf32>
    %66 = vector.shape_cast %65 : vector<1x1x16xf32> to vector<1x16xf32>
    %67 = vector.broadcast %66 : vector<1x16xf32> to vector<16x16xf32>
    %68 = arith.addf %64, %67 : vector<16x16xf32>
    %69 = vector.shape_cast %68 : vector<16x16xf32> to vector<2x8x16xf32>
    %70 = arith.truncf %69 : vector<2x8x16xf32> to vector<2x8x16xbf16>
    %c0_36 = arith.constant 0 : index
    %c0_37 = arith.constant 0 : index
    %c2 = arith.constant 2 : index
    %c0_38 = arith.constant 0 : index
    %c0_39 = arith.constant 0 : index
    %71 = vector.load %arg3[%c0_36, %c0_37, %c2, %c0_38, %c0_39] : memref<2x2x3x32x16xbf16, #tpu.memory_space<vmem>>, vector<1x1x1x32x16xbf16>
    %72 = vector.shape_cast %71 : vector<1x1x1x32x16xbf16> to vector<32x16xbf16>
    %cst_40 = arith.constant dense<0.000000e+00> : vector<16x16xf32>
    %73 = tpu.matmul %51, %72, %cst_40 {dimension_numbers = #tpu.dot_dimension_numbers<[1], [0], [0], [1], [0, 0, 1, 1], [], []>} : vector<16x32xbf16>, vector<32x16xbf16>, vector<16x16xf32> -> vector<16x16xf32>
    %c0_41 = arith.constant 0 : index
    %c2_42 = arith.constant 2 : index
    %c0_43 = arith.constant 0 : index
    %74 = vector.load %arg7[%c0_41, %c2_42, %c0_43] : memref<2x13x128xf32, #tpu.memory_space<vmem>>, vector<1x1x16xf32>
    %75 = vector.shape_cast %74 : vector<1x1x16xf32> to vector<1x16xf32>
    %76 = vector.broadcast %75 : vector<1x16xf32> to vector<16x16xf32>
    %77 = arith.addf %73, %76 : vector<16x16xf32>
    %78 = vector.shape_cast %77 : vector<16x16xf32> to vector<2x8x16xf32>
    %79 = arith.truncf %78 : vector<2x8x16xf32> to vector<2x8x16xbf16>
    "tpu.trace_start"() <{level = 10 : i32, message = "bqd,bkd->bqk"}> : () -> ()
    %cst_44 = arith.constant dense<0.000000e+00> : vector<2x8x8xf32>
    %80 = tpu.matmul %61, %70, %cst_44 {dimension_numbers = #tpu.dot_dimension_numbers<[2], [2], [1], [1], [0, 0, 0, 1, 1, 1], [0], [0]>} : vector<2x8x16xbf16>, vector<2x8x16xbf16>, vector<2x8x8xf32> -> vector<2x8x8xf32>
    "tpu.trace_stop"() : () -> ()
    %cst_45 = arith.constant 2.500000e-01 : f32
    %81 = vector.broadcast %cst_45 : f32 to vector<2x8x8xf32>
    %82 = arith.mulf %80, %81 : vector<2x8x8xf32>
    %83 = arith.addf %82, %50 : vector<2x8x8xf32>
    %cst_46 = arith.constant dense<0xFF800000> : vector<2x8xf32>
    %84 = vector.multi_reduction <maximumf>, %83, %cst_46 [2] : vector<2x8x8xf32> to vector<2x8xf32>
    %85 = vector.shape_cast %84 : vector<2x8xf32> to vector<2x8x1xf32>
    %86 = vector.broadcast %85 : vector<2x8x1xf32> to vector<2x8x8xf32>
    %87 = arith.subf %83, %86 : vector<2x8x8xf32>
    %88 = math.exp %87 : vector<2x8x8xf32>
    %cst_47 = arith.constant dense<0.000000e+00> : vector<2x8xf32>
    %89 = vector.multi_reduction <add>, %88, %cst_47 [2] : vector<2x8x8xf32> to vector<2x8xf32>
    %90 = vector.shape_cast %89 : vector<2x8xf32> to vector<2x8x1xf32>
    %91 = tpu.reciprocal %90 {approx = true} : vector<2x8x1xf32> -> vector<2x8x1xf32>
    %92 = vector.broadcast %91 : vector<2x8x1xf32> to vector<2x8x8xf32>
    %93 = arith.mulf %88, %92 : vector<2x8x8xf32>
    %94 = arith.truncf %93 : vector<2x8x8xf32> to vector<2x8x8xbf16>
    "tpu.trace_start"() <{level = 10 : i32, message = "bqk,bkd->bqd"}> : () -> ()
    %cst_48 = arith.constant dense<0.000000e+00> : vector<2x8x16xf32>
    %95 = tpu.matmul %94, %79, %cst_48 {dimension_numbers = #tpu.dot_dimension_numbers<[2], [1], [1], [2], [0, 0, 0, 1, 1, 2], [0], [0]>} : vector<2x8x8xbf16>, vector<2x8x16xbf16>, vector<2x8x16xf32> -> vector<2x8x16xf32>
    "tpu.trace_stop"() : () -> ()
    %96 = vector.shape_cast %95 : vector<2x8x16xf32> to vector<16x16xf32>
    %97 = arith.truncf %96 : vector<16x16xf32> to vector<16x16xbf16>
    %c0_49 = arith.constant 0 : index
    %c0_50 = arith.constant 0 : index
    %c0_51 = arith.constant 0 : index
    %c0_52 = arith.constant 0 : index
    %98 = vector.load %arg4[%c0_49, %c0_50, %c0_51, %c0_52] : memref<2x2x16x32xbf16, #tpu.memory_space<vmem>>, vector<1x1x16x32xbf16>
    %99 = vector.shape_cast %98 : vector<1x1x16x32xbf16> to vector<16x32xbf16>
    %cst_53 = arith.constant dense<0.000000e+00> : vector<16x32xf32>
    %100 = tpu.matmul %97, %99, %cst_53 {dimension_numbers = #tpu.dot_dimension_numbers<[1], [0], [0], [1], [0, 0, 1, 1], [], []>} : vector<16x16xbf16>, vector<16x32xbf16>, vector<16x32xf32> -> vector<16x32xf32>
    %101 = arith.addf %52, %100 : vector<16x32xf32>
    %c0_54 = arith.constant 0 : index
    %c1_55 = arith.constant 1 : index
    %c0_56 = arith.constant 0 : index
    %c0_57 = arith.constant 0 : index
    %c0_58 = arith.constant 0 : index
    %102 = vector.load %arg3[%c0_54, %c1_55, %c0_56, %c0_57, %c0_58] : memref<2x2x3x32x16xbf16, #tpu.memory_space<vmem>>, vector<1x1x1x32x16xbf16>
    %103 = vector.shape_cast %102 : vector<1x1x1x32x16xbf16> to vector<32x16xbf16>
    %cst_59 = arith.constant dense<0.000000e+00> : vector<16x16xf32>
    %104 = tpu.matmul %51, %103, %cst_59 {dimension_numbers = #tpu.dot_dimension_numbers<[1], [0], [0], [1], [0, 0, 1, 1], [], []>} : vector<16x32xbf16>, vector<32x16xbf16>, vector<16x16xf32> -> vector<16x16xf32>
    %c0_60 = arith.constant 0 : index
    %c3 = arith.constant 3 : index
    %c0_61 = arith.constant 0 : index
    %105 = vector.load %arg7[%c0_60, %c3, %c0_61] : memref<2x13x128xf32, #tpu.memory_space<vmem>>, vector<1x1x16xf32>
    %106 = vector.shape_cast %105 : vector<1x1x16xf32> to vector<1x16xf32>
    %107 = vector.broadcast %106 : vector<1x16xf32> to vector<16x16xf32>
    %108 = arith.addf %104, %107 : vector<16x16xf32>
    %109 = vector.shape_cast %108 : vector<16x16xf32> to vector<2x8x16xf32>
    %110 = arith.truncf %109 : vector<2x8x16xf32> to vector<2x8x16xbf16>
    %c0_62 = arith.constant 0 : index
    %c1_63 = arith.constant 1 : index
    %c1_64 = arith.constant 1 : index
    %c0_65 = arith.constant 0 : index
    %c0_66 = arith.constant 0 : index
    %111 = vector.load %arg3[%c0_62, %c1_63, %c1_64, %c0_65, %c0_66] : memref<2x2x3x32x16xbf16, #tpu.memory_space<vmem>>, vector<1x1x1x32x16xbf16>
    %112 = vector.shape_cast %111 : vector<1x1x1x32x16xbf16> to vector<32x16xbf16>
    %cst_67 = arith.constant dense<0.000000e+00> : vector<16x16xf32>
    %113 = tpu.matmul %51, %112, %cst_67 {dimension_numbers = #tpu.dot_dimension_numbers<[1], [0], [0], [1], [0, 0, 1, 1], [], []>} : vector<16x32xbf16>, vector<32x16xbf16>, vector<16x16xf32> -> vector<16x16xf32>
    %c0_68 = arith.constant 0 : index
    %c4 = arith.constant 4 : index
    %c0_69 = arith.constant 0 : index
    %114 = vector.load %arg7[%c0_68, %c4, %c0_69] : memref<2x13x128xf32, #tpu.memory_space<vmem>>, vector<1x1x16xf32>
    %115 = vector.shape_cast %114 : vector<1x1x16xf32> to vector<1x16xf32>
    %116 = vector.broadcast %115 : vector<1x16xf32> to vector<16x16xf32>
    %117 = arith.addf %113, %116 : vector<16x16xf32>
    %118 = vector.shape_cast %117 : vector<16x16xf32> to vector<2x8x16xf32>
    %119 = arith.truncf %118 : vector<2x8x16xf32> to vector<2x8x16xbf16>
    %c0_70 = arith.constant 0 : index
    %c1_71 = arith.constant 1 : index
    %c2_72 = arith.constant 2 : index
    %c0_73 = arith.constant 0 : index
    %c0_74 = arith.constant 0 : index
    %120 = vector.load %arg3[%c0_70, %c1_71, %c2_72, %c0_73, %c0_74] : memref<2x2x3x32x16xbf16, #tpu.memory_space<vmem>>, vector<1x1x1x32x16xbf16>
    %121 = vector.shape_cast %120 : vector<1x1x1x32x16xbf16> to vector<32x16xbf16>
    %cst_75 = arith.constant dense<0.000000e+00> : vector<16x16xf32>
    %122 = tpu.matmul %51, %121, %cst_75 {dimension_numbers = #tpu.dot_dimension_numbers<[1], [0], [0], [1], [0, 0, 1, 1], [], []>} : vector<16x32xbf16>, vector<32x16xbf16>, vector<16x16xf32> -> vector<16x16xf32>
    %c0_76 = arith.constant 0 : index
    %c5 = arith.constant 5 : index
    %c0_77 = arith.constant 0 : index
    %123 = vector.load %arg7[%c0_76, %c5, %c0_77] : memref<2x13x128xf32, #tpu.memory_space<vmem>>, vector<1x1x16xf32>
    %124 = vector.shape_cast %123 : vector<1x1x16xf32> to vector<1x16xf32>
    %125 = vector.broadcast %124 : vector<1x16xf32> to vector<16x16xf32>
    %126 = arith.addf %122, %125 : vector<16x16xf32>
    %127 = vector.shape_cast %126 : vector<16x16xf32> to vector<2x8x16xf32>
    %128 = arith.truncf %127 : vector<2x8x16xf32> to vector<2x8x16xbf16>
    "tpu.trace_start"() <{level = 10 : i32, message = "bqd,bkd->bqk"}> : () -> ()
    %cst_78 = arith.constant dense<0.000000e+00> : vector<2x8x8xf32>
    %129 = tpu.matmul %110, %119, %cst_78 {dimension_numbers = #tpu.dot_dimension_numbers<[2], [2], [1], [1], [0, 0, 0, 1, 1, 1], [0], [0]>} : vector<2x8x16xbf16>, vector<2x8x16xbf16>, vector<2x8x8xf32> -> vector<2x8x8xf32>
    "tpu.trace_stop"() : () -> ()
    %cst_79 = arith.constant 2.500000e-01 : f32
    %130 = vector.broadcast %cst_79 : f32 to vector<2x8x8xf32>
    %131 = arith.mulf %129, %130 : vector<2x8x8xf32>
    %132 = arith.addf %131, %50 : vector<2x8x8xf32>
    %cst_80 = arith.constant dense<0xFF800000> : vector<2x8xf32>
    %133 = vector.multi_reduction <maximumf>, %132, %cst_80 [2] : vector<2x8x8xf32> to vector<2x8xf32>
    %134 = vector.shape_cast %133 : vector<2x8xf32> to vector<2x8x1xf32>
    %135 = vector.broadcast %134 : vector<2x8x1xf32> to vector<2x8x8xf32>
    %136 = arith.subf %132, %135 : vector<2x8x8xf32>
    %137 = math.exp %136 : vector<2x8x8xf32>
    %cst_81 = arith.constant dense<0.000000e+00> : vector<2x8xf32>
    %138 = vector.multi_reduction <add>, %137, %cst_81 [2] : vector<2x8x8xf32> to vector<2x8xf32>
    %139 = vector.shape_cast %138 : vector<2x8xf32> to vector<2x8x1xf32>
    %140 = tpu.reciprocal %139 {approx = true} : vector<2x8x1xf32> -> vector<2x8x1xf32>
    %141 = vector.broadcast %140 : vector<2x8x1xf32> to vector<2x8x8xf32>
    %142 = arith.mulf %137, %141 : vector<2x8x8xf32>
    %143 = arith.truncf %142 : vector<2x8x8xf32> to vector<2x8x8xbf16>
    "tpu.trace_start"() <{level = 10 : i32, message = "bqk,bkd->bqd"}> : () -> ()
    %cst_82 = arith.constant dense<0.000000e+00> : vector<2x8x16xf32>
    %144 = tpu.matmul %143, %128, %cst_82 {dimension_numbers = #tpu.dot_dimension_numbers<[2], [1], [1], [2], [0, 0, 0, 1, 1, 2], [0], [0]>} : vector<2x8x8xbf16>, vector<2x8x16xbf16>, vector<2x8x16xf32> -> vector<2x8x16xf32>
    "tpu.trace_stop"() : () -> ()
    %145 = vector.shape_cast %144 : vector<2x8x16xf32> to vector<16x16xf32>
    %146 = arith.truncf %145 : vector<16x16xf32> to vector<16x16xbf16>
    %c0_83 = arith.constant 0 : index
    %c1_84 = arith.constant 1 : index
    %c0_85 = arith.constant 0 : index
    %c0_86 = arith.constant 0 : index
    %147 = vector.load %arg4[%c0_83, %c1_84, %c0_85, %c0_86] : memref<2x2x16x32xbf16, #tpu.memory_space<vmem>>, vector<1x1x16x32xbf16>
    %148 = vector.shape_cast %147 : vector<1x1x16x32xbf16> to vector<16x32xbf16>
    %cst_87 = arith.constant dense<0.000000e+00> : vector<16x32xf32>
    %149 = tpu.matmul %146, %148, %cst_87 {dimension_numbers = #tpu.dot_dimension_numbers<[1], [0], [0], [1], [0, 0, 1, 1], [], []>} : vector<16x16xbf16>, vector<16x32xbf16>, vector<16x32xf32> -> vector<16x32xf32>
    %150 = arith.addf %101, %149 : vector<16x32xf32>
    %c0_88 = arith.constant 0 : index
    %c6 = arith.constant 6 : index
    %c0_89 = arith.constant 0 : index
    %151 = vector.load %arg7[%c0_88, %c6, %c0_89] : memref<2x13x128xf32, #tpu.memory_space<vmem>>, vector<1x1x32xf32>
    %152 = vector.shape_cast %151 : vector<1x1x32xf32> to vector<1x32xf32>
    %153 = vector.broadcast %152 : vector<1x32xf32> to vector<16x32xf32>
    %154 = arith.addf %150, %153 : vector<16x32xf32>
    %155 = arith.addf %42, %154 : vector<16x32xf32>
    %c0_90 = arith.constant 0 : index
    %c7 = arith.constant 7 : index
    %c0_91 = arith.constant 0 : index
    %156 = vector.load %arg7[%c0_90, %c7, %c0_91] : memref<2x13x128xf32, #tpu.memory_space<vmem>>, vector<1x1x32xf32>
    %157 = vector.shape_cast %156 : vector<1x1x32xf32> to vector<1x32xf32>
    %c0_92 = arith.constant 0 : index
    %c8 = arith.constant 8 : index
    %c0_93 = arith.constant 0 : index
    %158 = vector.load %arg7[%c0_92, %c8, %c0_93] : memref<2x13x128xf32, #tpu.memory_space<vmem>>, vector<1x1x32xf32>
    %159 = vector.shape_cast %158 : vector<1x1x32xf32> to vector<1x32xf32>
    %cst_94 = arith.constant dense<0.000000e+00> : vector<16xf32>
    %160 = vector.multi_reduction <add>, %155, %cst_94 [1] : vector<16x32xf32> to vector<16xf32>
    %161 = vector.shape_cast %160 : vector<16xf32> to vector<16x1xf32>
    %cst_95 = arith.constant 3.200000e+01 : f32
    %162 = vector.broadcast %cst_95 : f32 to vector<16x1xf32>
    %163 = arith.divf %161, %162 : vector<16x1xf32>
    %164 = vector.broadcast %163 : vector<16x1xf32> to vector<16x32xf32>
    %165 = arith.subf %155, %164 : vector<16x32xf32>
    %166 = arith.mulf %165, %165 : vector<16x32xf32>
    %cst_96 = arith.constant dense<0.000000e+00> : vector<16xf32>
    %167 = vector.multi_reduction <add>, %166, %cst_96 [1] : vector<16x32xf32> to vector<16xf32>
    %168 = vector.shape_cast %167 : vector<16xf32> to vector<16x1xf32>
    %cst_97 = arith.constant 3.200000e+01 : f32
    %169 = vector.broadcast %cst_97 : f32 to vector<16x1xf32>
    %170 = arith.divf %168, %169 : vector<16x1xf32>
    %171 = vector.broadcast %163 : vector<16x1xf32> to vector<16x32xf32>
    %172 = arith.subf %155, %171 : vector<16x32xf32>
    %cst_98 = arith.constant 9.99999996E-13 : f32
    %173 = vector.broadcast %cst_98 : f32 to vector<16x1xf32>
    %174 = arith.addf %170, %173 : vector<16x1xf32>
    %175 = math.rsqrt %174 : vector<16x1xf32>
    %176 = vector.broadcast %175 : vector<16x1xf32> to vector<16x32xf32>
    %177 = arith.mulf %172, %176 : vector<16x32xf32>
    %178 = vector.broadcast %157 : vector<1x32xf32> to vector<16x32xf32>
    %179 = arith.mulf %177, %178 : vector<16x32xf32>
    %180 = vector.broadcast %159 : vector<1x32xf32> to vector<16x32xf32>
    %181 = arith.addf %179, %180 : vector<16x32xf32>
    %182 = arith.truncf %181 : vector<16x32xf32> to vector<16x32xbf16>
    %c0_99 = arith.constant 0 : index
    %c0_100 = arith.constant 0 : index
    %c0_101 = arith.constant 0 : index
    %183 = vector.load %arg5[%c0_99, %c0_100, %c0_101] : memref<2x32x64xbf16, #tpu.memory_space<vmem>>, vector<1x32x64xbf16>
    %184 = vector.shape_cast %183 : vector<1x32x64xbf16> to vector<32x64xbf16>
    %cst_102 = arith.constant dense<0.000000e+00> : vector<16x64xf32>
    %185 = tpu.matmul %182, %184, %cst_102 {dimension_numbers = #tpu.dot_dimension_numbers<[1], [0], [0], [1], [0, 0, 1, 1], [], []>} : vector<16x32xbf16>, vector<32x64xbf16>, vector<16x64xf32> -> vector<16x64xf32>
    %c0_103 = arith.constant 0 : index
    %c9 = arith.constant 9 : index
    %c0_104 = arith.constant 0 : index
    %186 = vector.load %arg7[%c0_103, %c9, %c0_104] : memref<2x13x128xf32, #tpu.memory_space<vmem>>, vector<1x1x64xf32>
    %187 = vector.shape_cast %186 : vector<1x1x64xf32> to vector<1x64xf32>
    %188 = vector.broadcast %187 : vector<1x64xf32> to vector<16x64xf32>
    %189 = arith.addf %185, %188 : vector<16x64xf32>
    %190 = arith.mulf %189, %189 : vector<16x64xf32>
    %191 = arith.mulf %189, %190 : vector<16x64xf32>
    %cst_105 = arith.constant 4.471500e-02 : f32
    %192 = vector.broadcast %cst_105 : f32 to vector<16x64xf32>
    %193 = arith.mulf %192, %191 : vector<16x64xf32>
    %194 = arith.addf %189, %193 : vector<16x64xf32>
    %cst_106 = arith.constant 0.797884583 : f32
    %195 = vector.broadcast %cst_106 : f32 to vector<16x64xf32>
    %196 = arith.mulf %195, %194 : vector<16x64xf32>
    %197 = math.tanh %196 : vector<16x64xf32>
    %cst_107 = arith.constant 1.000000e+00 : f32
    %198 = vector.broadcast %cst_107 : f32 to vector<16x64xf32>
    %199 = arith.addf %198, %197 : vector<16x64xf32>
    %cst_108 = arith.constant 5.000000e-01 : f32
    %200 = vector.broadcast %cst_108 : f32 to vector<16x64xf32>
    %201 = arith.mulf %200, %199 : vector<16x64xf32>
    %202 = arith.mulf %189, %201 : vector<16x64xf32>
    %203 = arith.truncf %202 : vector<16x64xf32> to vector<16x64xbf16>
    %c0_109 = arith.constant 0 : index
    %c0_110 = arith.constant 0 : index
    %c0_111 = arith.constant 0 : index
    %204 = vector.load %arg6[%c0_109, %c0_110, %c0_111] : memref<2x64x32xbf16, #tpu.memory_space<vmem>>, vector<1x64x32xbf16>
    %205 = vector.shape_cast %204 : vector<1x64x32xbf16> to vector<64x32xbf16>
    %cst_112 = arith.constant dense<0.000000e+00> : vector<16x32xf32>
    %206 = tpu.matmul %203, %205, %cst_112 {dimension_numbers = #tpu.dot_dimension_numbers<[1], [0], [0], [1], [0, 0, 1, 1], [], []>} : vector<16x64xbf16>, vector<64x32xbf16>, vector<16x32xf32> -> vector<16x32xf32>
    %c0_113 = arith.constant 0 : index
    %c10 = arith.constant 10 : index
    %c0_114 = arith.constant 0 : index
    %207 = vector.load %arg7[%c0_113, %c10, %c0_114] : memref<2x13x128xf32, #tpu.memory_space<vmem>>, vector<1x1x32xf32>
    %208 = vector.shape_cast %207 : vector<1x1x32xf32> to vector<1x32xf32>
    %209 = vector.broadcast %208 : vector<1x32xf32> to vector<16x32xf32>
    %210 = arith.addf %206, %209 : vector<16x32xf32>
    %211 = arith.addf %181, %210 : vector<16x32xf32>
    %c0_115 = arith.constant 0 : index
    %c11 = arith.constant 11 : index
    %c0_116 = arith.constant 0 : index
    %212 = vector.load %arg7[%c0_115, %c11, %c0_116] : memref<2x13x128xf32, #tpu.memory_space<vmem>>, vector<1x1x32xf32>
    %213 = vector.shape_cast %212 : vector<1x1x32xf32> to vector<1x32xf32>
    %c0_117 = arith.constant 0 : index
    %c12 = arith.constant 12 : index
    %c0_118 = arith.constant 0 : index
    %214 = vector.load %arg7[%c0_117, %c12, %c0_118] : memref<2x13x128xf32, #tpu.memory_space<vmem>>, vector<1x1x32xf32>
    %215 = vector.shape_cast %214 : vector<1x1x32xf32> to vector<1x32xf32>
    %cst_119 = arith.constant dense<0.000000e+00> : vector<16xf32>
    %216 = vector.multi_reduction <add>, %211, %cst_119 [1] : vector<16x32xf32> to vector<16xf32>
    %217 = vector.shape_cast %216 : vector<16xf32> to vector<16x1xf32>
    %cst_120 = arith.constant 3.200000e+01 : f32
    %218 = vector.broadcast %cst_120 : f32 to vector<16x1xf32>
    %219 = arith.divf %217, %218 : vector<16x1xf32>
    %220 = vector.broadcast %219 : vector<16x1xf32> to vector<16x32xf32>
    %221 = arith.subf %211, %220 : vector<16x32xf32>
    %222 = arith.mulf %221, %221 : vector<16x32xf32>
    %cst_121 = arith.constant dense<0.000000e+00> : vector<16xf32>
    %223 = vector.multi_reduction <add>, %222, %cst_121 [1] : vector<16x32xf32> to vector<16xf32>
    %224 = vector.shape_cast %223 : vector<16xf32> to vector<16x1xf32>
    %cst_122 = arith.constant 3.200000e+01 : f32
    %225 = vector.broadcast %cst_122 : f32 to vector<16x1xf32>
    %226 = arith.divf %224, %225 : vector<16x1xf32>
    %227 = vector.broadcast %219 : vector<16x1xf32> to vector<16x32xf32>
    %228 = arith.subf %211, %227 : vector<16x32xf32>
    %cst_123 = arith.constant 9.99999996E-13 : f32
    %229 = vector.broadcast %cst_123 : f32 to vector<16x1xf32>
    %230 = arith.addf %226, %229 : vector<16x1xf32>
    %231 = math.rsqrt %230 : vector<16x1xf32>
    %232 = vector.broadcast %231 : vector<16x1xf32> to vector<16x32xf32>
    %233 = arith.mulf %228, %232 : vector<16x32xf32>
    %234 = vector.broadcast %213 : vector<1x32xf32> to vector<16x32xf32>
    %235 = arith.mulf %233, %234 : vector<16x32xf32>
    %236 = vector.broadcast %215 : vector<1x32xf32> to vector<16x32xf32>
    %237 = arith.addf %235, %236 : vector<16x32xf32>
    %238 = arith.truncf %237 : vector<16x32xf32> to vector<16x32xbf16>
    %cst_124 = arith.constant 0.000000e+00 : f32
    %239 = vector.broadcast %cst_124 : f32 to vector<16x32xf32>
    %c1_125 = arith.constant 1 : index
    %c0_126 = arith.constant 0 : index
    %c0_127 = arith.constant 0 : index
    %c0_128 = arith.constant 0 : index
    %c0_129 = arith.constant 0 : index
    %240 = vector.load %arg3[%c1_125, %c0_126, %c0_127, %c0_128, %c0_129] : memref<2x2x3x32x16xbf16, #tpu.memory_space<vmem>>, vector<1x1x1x32x16xbf16>
    %241 = vector.shape_cast %240 : vector<1x1x1x32x16xbf16> to vector<32x16xbf16>
    %cst_130 = arith.constant dense<0.000000e+00> : vector<16x16xf32>
    %242 = tpu.matmul %238, %241, %cst_130 {dimension_numbers = #tpu.dot_dimension_numbers<[1], [0], [0], [1], [0, 0, 1, 1], [], []>} : vector<16x32xbf16>, vector<32x16xbf16>, vector<16x16xf32> -> vector<16x16xf32>
    %c1_131 = arith.constant 1 : index
    %c0_132 = arith.constant 0 : index
    %c0_133 = arith.constant 0 : index
    %243 = vector.load %arg7[%c1_131, %c0_132, %c0_133] : memref<2x13x128xf32, #tpu.memory_space<vmem>>, vector<1x1x16xf32>
    %244 = vector.shape_cast %243 : vector<1x1x16xf32> to vector<1x16xf32>
    %245 = vector.broadcast %244 : vector<1x16xf32> to vector<16x16xf32>
    %246 = arith.addf %242, %245 : vector<16x16xf32>
    %247 = vector.shape_cast %246 : vector<16x16xf32> to vector<2x8x16xf32>
    %248 = arith.truncf %247 : vector<2x8x16xf32> to vector<2x8x16xbf16>
    %c1_134 = arith.constant 1 : index
    %c0_135 = arith.constant 0 : index
    %c1_136 = arith.constant 1 : index
    %c0_137 = arith.constant 0 : index
    %c0_138 = arith.constant 0 : index
    %249 = vector.load %arg3[%c1_134, %c0_135, %c1_136, %c0_137, %c0_138] : memref<2x2x3x32x16xbf16, #tpu.memory_space<vmem>>, vector<1x1x1x32x16xbf16>
    %250 = vector.shape_cast %249 : vector<1x1x1x32x16xbf16> to vector<32x16xbf16>
    %cst_139 = arith.constant dense<0.000000e+00> : vector<16x16xf32>
    %251 = tpu.matmul %238, %250, %cst_139 {dimension_numbers = #tpu.dot_dimension_numbers<[1], [0], [0], [1], [0, 0, 1, 1], [], []>} : vector<16x32xbf16>, vector<32x16xbf16>, vector<16x16xf32> -> vector<16x16xf32>
    %c1_140 = arith.constant 1 : index
    %c1_141 = arith.constant 1 : index
    %c0_142 = arith.constant 0 : index
    %252 = vector.load %arg7[%c1_140, %c1_141, %c0_142] : memref<2x13x128xf32, #tpu.memory_space<vmem>>, vector<1x1x16xf32>
    %253 = vector.shape_cast %252 : vector<1x1x16xf32> to vector<1x16xf32>
    %254 = vector.broadcast %253 : vector<1x16xf32> to vector<16x16xf32>
    %255 = arith.addf %251, %254 : vector<16x16xf32>
    %256 = vector.shape_cast %255 : vector<16x16xf32> to vector<2x8x16xf32>
    %257 = arith.truncf %256 : vector<2x8x16xf32> to vector<2x8x16xbf16>
    %c1_143 = arith.constant 1 : index
    %c0_144 = arith.constant 0 : index
    %c2_145 = arith.constant 2 : index
    %c0_146 = arith.constant 0 : index
    %c0_147 = arith.constant 0 : index
    %258 = vector.load %arg3[%c1_143, %c0_144, %c2_145, %c0_146, %c0_147] : memref<2x2x3x32x16xbf16, #tpu.memory_space<vmem>>, vector<1x1x1x32x16xbf16>
    %259 = vector.shape_cast %258 : vector<1x1x1x32x16xbf16> to vector<32x16xbf16>
    %cst_148 = arith.constant dense<0.000000e+00> : vector<16x16xf32>
    %260 = tpu.matmul %238, %259, %cst_148 {dimension_numbers = #tpu.dot_dimension_numbers<[1], [0], [0], [1], [0, 0, 1, 1], [], []>} : vector<16x32xbf16>, vector<32x16xbf16>, vector<16x16xf32> -> vector<16x16xf32>
    %c1_149 = arith.constant 1 : index
    %c2_150 = arith.constant 2 : index
    %c0_151 = arith.constant 0 : index
    %261 = vector.load %arg7[%c1_149, %c2_150, %c0_151] : memref<2x13x128xf32, #tpu.memory_space<vmem>>, vector<1x1x16xf32>
    %262 = vector.shape_cast %261 : vector<1x1x16xf32> to vector<1x16xf32>
    %263 = vector.broadcast %262 : vector<1x16xf32> to vector<16x16xf32>
    %264 = arith.addf %260, %263 : vector<16x16xf32>
    %265 = vector.shape_cast %264 : vector<16x16xf32> to vector<2x8x16xf32>
    %266 = arith.truncf %265 : vector<2x8x16xf32> to vector<2x8x16xbf16>
    "tpu.trace_start"() <{level = 10 : i32, message = "bqd,bkd->bqk"}> : () -> ()
    %cst_152 = arith.constant dense<0.000000e+00> : vector<2x8x8xf32>
    %267 = tpu.matmul %248, %257, %cst_152 {dimension_numbers = #tpu.dot_dimension_numbers<[2], [2], [1], [1], [0, 0, 0, 1, 1, 1], [0], [0]>} : vector<2x8x16xbf16>, vector<2x8x16xbf16>, vector<2x8x8xf32> -> vector<2x8x8xf32>
    "tpu.trace_stop"() : () -> ()
    %cst_153 = arith.constant 2.500000e-01 : f32
    %268 = vector.broadcast %cst_153 : f32 to vector<2x8x8xf32>
    %269 = arith.mulf %267, %268 : vector<2x8x8xf32>
    %270 = arith.addf %269, %50 : vector<2x8x8xf32>
    %cst_154 = arith.constant dense<0xFF800000> : vector<2x8xf32>
    %271 = vector.multi_reduction <maximumf>, %270, %cst_154 [2] : vector<2x8x8xf32> to vector<2x8xf32>
    %272 = vector.shape_cast %271 : vector<2x8xf32> to vector<2x8x1xf32>
    %273 = vector.broadcast %272 : vector<2x8x1xf32> to vector<2x8x8xf32>
    %274 = arith.subf %270, %273 : vector<2x8x8xf32>
    %275 = math.exp %274 : vector<2x8x8xf32>
    %cst_155 = arith.constant dense<0.000000e+00> : vector<2x8xf32>
    %276 = vector.multi_reduction <add>, %275, %cst_155 [2] : vector<2x8x8xf32> to vector<2x8xf32>
    %277 = vector.shape_cast %276 : vector<2x8xf32> to vector<2x8x1xf32>
    %278 = tpu.reciprocal %277 {approx = true} : vector<2x8x1xf32> -> vector<2x8x1xf32>
    %279 = vector.broadcast %278 : vector<2x8x1xf32> to vector<2x8x8xf32>
    %280 = arith.mulf %275, %279 : vector<2x8x8xf32>
    %281 = arith.truncf %280 : vector<2x8x8xf32> to vector<2x8x8xbf16>
    "tpu.trace_start"() <{level = 10 : i32, message = "bqk,bkd->bqd"}> : () -> ()
    %cst_156 = arith.constant dense<0.000000e+00> : vector<2x8x16xf32>
    %282 = tpu.matmul %281, %266, %cst_156 {dimension_numbers = #tpu.dot_dimension_numbers<[2], [1], [1], [2], [0, 0, 0, 1, 1, 2], [0], [0]>} : vector<2x8x8xbf16>, vector<2x8x16xbf16>, vector<2x8x16xf32> -> vector<2x8x16xf32>
    "tpu.trace_stop"() : () -> ()
    %283 = vector.shape_cast %282 : vector<2x8x16xf32> to vector<16x16xf32>
    %284 = arith.truncf %283 : vector<16x16xf32> to vector<16x16xbf16>
    %c1_157 = arith.constant 1 : index
    %c0_158 = arith.constant 0 : index
    %c0_159 = arith.constant 0 : index
    %c0_160 = arith.constant 0 : index
    %285 = vector.load %arg4[%c1_157, %c0_158, %c0_159, %c0_160] : memref<2x2x16x32xbf16, #tpu.memory_space<vmem>>, vector<1x1x16x32xbf16>
    %286 = vector.shape_cast %285 : vector<1x1x16x32xbf16> to vector<16x32xbf16>
    %cst_161 = arith.constant dense<0.000000e+00> : vector<16x32xf32>
    %287 = tpu.matmul %284, %286, %cst_161 {dimension_numbers = #tpu.dot_dimension_numbers<[1], [0], [0], [1], [0, 0, 1, 1], [], []>} : vector<16x16xbf16>, vector<16x32xbf16>, vector<16x32xf32> -> vector<16x32xf32>
    %288 = arith.addf %239, %287 : vector<16x32xf32>
    %c1_162 = arith.constant 1 : index
    %c1_163 = arith.constant 1 : index
    %c0_164 = arith.constant 0 : index
    %c0_165 = arith.constant 0 : index
    %c0_166 = arith.constant 0 : index
    %289 = vector.load %arg3[%c1_162, %c1_163, %c0_164, %c0_165, %c0_166] : memref<2x2x3x32x16xbf16, #tpu.memory_space<vmem>>, vector<1x1x1x32x16xbf16>
    %290 = vector.shape_cast %289 : vector<1x1x1x32x16xbf16> to vector<32x16xbf16>
    %cst_167 = arith.constant dense<0.000000e+00> : vector<16x16xf32>
    %291 = tpu.matmul %238, %290, %cst_167 {dimension_numbers = #tpu.dot_dimension_numbers<[1], [0], [0], [1], [0, 0, 1, 1], [], []>} : vector<16x32xbf16>, vector<32x16xbf16>, vector<16x16xf32> -> vector<16x16xf32>
    %c1_168 = arith.constant 1 : index
    %c3_169 = arith.constant 3 : index
    %c0_170 = arith.constant 0 : index
    %292 = vector.load %arg7[%c1_168, %c3_169, %c0_170] : memref<2x13x128xf32, #tpu.memory_space<vmem>>, vector<1x1x16xf32>
    %293 = vector.shape_cast %292 : vector<1x1x16xf32> to vector<1x16xf32>
    %294 = vector.broadcast %293 : vector<1x16xf32> to vector<16x16xf32>
    %295 = arith.addf %291, %294 : vector<16x16xf32>
    %296 = vector.shape_cast %295 : vector<16x16xf32> to vector<2x8x16xf32>
    %297 = arith.truncf %296 : vector<2x8x16xf32> to vector<2x8x16xbf16>
    %c1_171 = arith.constant 1 : index
    %c1_172 = arith.constant 1 : index
    %c1_173 = arith.constant 1 : index
    %c0_174 = arith.constant 0 : index
    %c0_175 = arith.constant 0 : index
    %298 = vector.load %arg3[%c1_171, %c1_172, %c1_173, %c0_174, %c0_175] : memref<2x2x3x32x16xbf16, #tpu.memory_space<vmem>>, vector<1x1x1x32x16xbf16>
    %299 = vector.shape_cast %298 : vector<1x1x1x32x16xbf16> to vector<32x16xbf16>
    %cst_176 = arith.constant dense<0.000000e+00> : vector<16x16xf32>
    %300 = tpu.matmul %238, %299, %cst_176 {dimension_numbers = #tpu.dot_dimension_numbers<[1], [0], [0], [1], [0, 0, 1, 1], [], []>} : vector<16x32xbf16>, vector<32x16xbf16>, vector<16x16xf32> -> vector<16x16xf32>
    %c1_177 = arith.constant 1 : index
    %c4_178 = arith.constant 4 : index
    %c0_179 = arith.constant 0 : index
    %301 = vector.load %arg7[%c1_177, %c4_178, %c0_179] : memref<2x13x128xf32, #tpu.memory_space<vmem>>, vector<1x1x16xf32>
    %302 = vector.shape_cast %301 : vector<1x1x16xf32> to vector<1x16xf32>
    %303 = vector.broadcast %302 : vector<1x16xf32> to vector<16x16xf32>
    %304 = arith.addf %300, %303 : vector<16x16xf32>
    %305 = vector.shape_cast %304 : vector<16x16xf32> to vector<2x8x16xf32>
    %306 = arith.truncf %305 : vector<2x8x16xf32> to vector<2x8x16xbf16>
    %c1_180 = arith.constant 1 : index
    %c1_181 = arith.constant 1 : index
    %c2_182 = arith.constant 2 : index
    %c0_183 = arith.constant 0 : index
    %c0_184 = arith.constant 0 : index
    %307 = vector.load %arg3[%c1_180, %c1_181, %c2_182, %c0_183, %c0_184] : memref<2x2x3x32x16xbf16, #tpu.memory_space<vmem>>, vector<1x1x1x32x16xbf16>
    %308 = vector.shape_cast %307 : vector<1x1x1x32x16xbf16> to vector<32x16xbf16>
    %cst_185 = arith.constant dense<0.000000e+00> : vector<16x16xf32>
    %309 = tpu.matmul %238, %308, %cst_185 {dimension_numbers = #tpu.dot_dimension_numbers<[1], [0], [0], [1], [0, 0, 1, 1], [], []>} : vector<16x32xbf16>, vector<32x16xbf16>, vector<16x16xf32> -> vector<16x16xf32>
    %c1_186 = arith.constant 1 : index
    %c5_187 = arith.constant 5 : index
    %c0_188 = arith.constant 0 : index
    %310 = vector.load %arg7[%c1_186, %c5_187, %c0_188] : memref<2x13x128xf32, #tpu.memory_space<vmem>>, vector<1x1x16xf32>
    %311 = vector.shape_cast %310 : vector<1x1x16xf32> to vector<1x16xf32>
    %312 = vector.broadcast %311 : vector<1x16xf32> to vector<16x16xf32>
    %313 = arith.addf %309, %312 : vector<16x16xf32>
    %314 = vector.shape_cast %313 : vector<16x16xf32> to vector<2x8x16xf32>
    %315 = arith.truncf %314 : vector<2x8x16xf32> to vector<2x8x16xbf16>
    "tpu.trace_start"() <{level = 10 : i32, message = "bqd,bkd->bqk"}> : () -> ()
    %cst_189 = arith.constant dense<0.000000e+00> : vector<2x8x8xf32>
    %316 = tpu.matmul %297, %306, %cst_189 {dimension_numbers = #tpu.dot_dimension_numbers<[2], [2], [1], [1], [0, 0, 0, 1, 1, 1], [0], [0]>} : vector<2x8x16xbf16>, vector<2x8x16xbf16>, vector<2x8x8xf32> -> vector<2x8x8xf32>
    "tpu.trace_stop"() : () -> ()
    %cst_190 = arith.constant 2.500000e-01 : f32
    %317 = vector.broadcast %cst_190 : f32 to vector<2x8x8xf32>
    %318 = arith.mulf %316, %317 : vector<2x8x8xf32>
    %319 = arith.addf %318, %50 : vector<2x8x8xf32>
    %cst_191 = arith.constant dense<0xFF800000> : vector<2x8xf32>
    %320 = vector.multi_reduction <maximumf>, %319, %cst_191 [2] : vector<2x8x8xf32> to vector<2x8xf32>
    %321 = vector.shape_cast %320 : vector<2x8xf32> to vector<2x8x1xf32>
    %322 = vector.broadcast %321 : vector<2x8x1xf32> to vector<2x8x8xf32>
    %323 = arith.subf %319, %322 : vector<2x8x8xf32>
    %324 = math.exp %323 : vector<2x8x8xf32>
    %cst_192 = arith.constant dense<0.000000e+00> : vector<2x8xf32>
    %325 = vector.multi_reduction <add>, %324, %cst_192 [2] : vector<2x8x8xf32> to vector<2x8xf32>
    %326 = vector.shape_cast %325 : vector<2x8xf32> to vector<2x8x1xf32>
    %327 = tpu.reciprocal %326 {approx = true} : vector<2x8x1xf32> -> vector<2x8x1xf32>
    %328 = vector.broadcast %327 : vector<2x8x1xf32> to vector<2x8x8xf32>
    %329 = arith.mulf %324, %328 : vector<2x8x8xf32>
    %330 = arith.truncf %329 : vector<2x8x8xf32> to vector<2x8x8xbf16>
    "tpu.trace_start"() <{level = 10 : i32, message = "bqk,bkd->bqd"}> : () -> ()
    %cst_193 = arith.constant dense<0.000000e+00> : vector<2x8x16xf32>
    %331 = tpu.matmul %330, %315, %cst_193 {dimension_numbers = #tpu.dot_dimension_numbers<[2], [1], [1], [2], [0, 0, 0, 1, 1, 2], [0], [0]>} : vector<2x8x8xbf16>, vector<2x8x16xbf16>, vector<2x8x16xf32> -> vector<2x8x16xf32>
    "tpu.trace_stop"() : () -> ()
    %332 = vector.shape_cast %331 : vector<2x8x16xf32> to vector<16x16xf32>
    %333 = arith.truncf %332 : vector<16x16xf32> to vector<16x16xbf16>
    %c1_194 = arith.constant 1 : index
    %c1_195 = arith.constant 1 : index
    %c0_196 = arith.constant 0 : index
    %c0_197 = arith.constant 0 : index
    %334 = vector.load %arg4[%c1_194, %c1_195, %c0_196, %c0_197] : memref<2x2x16x32xbf16, #tpu.memory_space<vmem>>, vector<1x1x16x32xbf16>
    %335 = vector.shape_cast %334 : vector<1x1x16x32xbf16> to vector<16x32xbf16>
    %cst_198 = arith.constant dense<0.000000e+00> : vector<16x32xf32>
    %336 = tpu.matmul %333, %335, %cst_198 {dimension_numbers = #tpu.dot_dimension_numbers<[1], [0], [0], [1], [0, 0, 1, 1], [], []>} : vector<16x16xbf16>, vector<16x32xbf16>, vector<16x32xf32> -> vector<16x32xf32>
    %337 = arith.addf %288, %336 : vector<16x32xf32>
    %c1_199 = arith.constant 1 : index
    %c6_200 = arith.constant 6 : index
    %c0_201 = arith.constant 0 : index
    %338 = vector.load %arg7[%c1_199, %c6_200, %c0_201] : memref<2x13x128xf32, #tpu.memory_space<vmem>>, vector<1x1x32xf32>
    %339 = vector.shape_cast %338 : vector<1x1x32xf32> to vector<1x32xf32>
    %340 = vector.broadcast %339 : vector<1x32xf32> to vector<16x32xf32>
    %341 = arith.addf %337, %340 : vector<16x32xf32>
    %342 = arith.addf %237, %341 : vector<16x32xf32>
    %c1_202 = arith.constant 1 : index
    %c7_203 = arith.constant 7 : index
    %c0_204 = arith.constant 0 : index
    %343 = vector.load %arg7[%c1_202, %c7_203, %c0_204] : memref<2x13x128xf32, #tpu.memory_space<vmem>>, vector<1x1x32xf32>
    %344 = vector.shape_cast %343 : vector<1x1x32xf32> to vector<1x32xf32>
    %c1_205 = arith.constant 1 : index
    %c8_206 = arith.constant 8 : index
    %c0_207 = arith.constant 0 : index
    %345 = vector.load %arg7[%c1_205, %c8_206, %c0_207] : memref<2x13x128xf32, #tpu.memory_space<vmem>>, vector<1x1x32xf32>
    %346 = vector.shape_cast %345 : vector<1x1x32xf32> to vector<1x32xf32>
    %cst_208 = arith.constant dense<0.000000e+00> : vector<16xf32>
    %347 = vector.multi_reduction <add>, %342, %cst_208 [1] : vector<16x32xf32> to vector<16xf32>
    %348 = vector.shape_cast %347 : vector<16xf32> to vector<16x1xf32>
    %cst_209 = arith.constant 3.200000e+01 : f32
    %349 = vector.broadcast %cst_209 : f32 to vector<16x1xf32>
    %350 = arith.divf %348, %349 : vector<16x1xf32>
    %351 = vector.broadcast %350 : vector<16x1xf32> to vector<16x32xf32>
    %352 = arith.subf %342, %351 : vector<16x32xf32>
    %353 = arith.mulf %352, %352 : vector<16x32xf32>
    %cst_210 = arith.constant dense<0.000000e+00> : vector<16xf32>
    %354 = vector.multi_reduction <add>, %353, %cst_210 [1] : vector<16x32xf32> to vector<16xf32>
    %355 = vector.shape_cast %354 : vector<16xf32> to vector<16x1xf32>
    %cst_211 = arith.constant 3.200000e+01 : f32
    %356 = vector.broadcast %cst_211 : f32 to vector<16x1xf32>
    %357 = arith.divf %355, %356 : vector<16x1xf32>
    %358 = vector.broadcast %350 : vector<16x1xf32> to vector<16x32xf32>
    %359 = arith.subf %342, %358 : vector<16x32xf32>
    %cst_212 = arith.constant 9.99999996E-13 : f32
    %360 = vector.broadcast %cst_212 : f32 to vector<16x1xf32>
    %361 = arith.addf %357, %360 : vector<16x1xf32>
    %362 = math.rsqrt %361 : vector<16x1xf32>
    %363 = vector.broadcast %362 : vector<16x1xf32> to vector<16x32xf32>
    %364 = arith.mulf %359, %363 : vector<16x32xf32>
    %365 = vector.broadcast %344 : vector<1x32xf32> to vector<16x32xf32>
    %366 = arith.mulf %364, %365 : vector<16x32xf32>
    %367 = vector.broadcast %346 : vector<1x32xf32> to vector<16x32xf32>
    %368 = arith.addf %366, %367 : vector<16x32xf32>
    %369 = arith.truncf %368 : vector<16x32xf32> to vector<16x32xbf16>
    %c1_213 = arith.constant 1 : index
    %c0_214 = arith.constant 0 : index
    %c0_215 = arith.constant 0 : index
    %370 = vector.load %arg5[%c1_213, %c0_214, %c0_215] : memref<2x32x64xbf16, #tpu.memory_space<vmem>>, vector<1x32x64xbf16>
    %371 = vector.shape_cast %370 : vector<1x32x64xbf16> to vector<32x64xbf16>
    %cst_216 = arith.constant dense<0.000000e+00> : vector<16x64xf32>
    %372 = tpu.matmul %369, %371, %cst_216 {dimension_numbers = #tpu.dot_dimension_numbers<[1], [0], [0], [1], [0, 0, 1, 1], [], []>} : vector<16x32xbf16>, vector<32x64xbf16>, vector<16x64xf32> -> vector<16x64xf32>
    %c1_217 = arith.constant 1 : index
    %c9_218 = arith.constant 9 : index
    %c0_219 = arith.constant 0 : index
    %373 = vector.load %arg7[%c1_217, %c9_218, %c0_219] : memref<2x13x128xf32, #tpu.memory_space<vmem>>, vector<1x1x64xf32>
    %374 = vector.shape_cast %373 : vector<1x1x64xf32> to vector<1x64xf32>
    %375 = vector.broadcast %374 : vector<1x64xf32> to vector<16x64xf32>
    %376 = arith.addf %372, %375 : vector<16x64xf32>
    %377 = arith.mulf %376, %376 : vector<16x64xf32>
    %378 = arith.mulf %376, %377 : vector<16x64xf32>
    %cst_220 = arith.constant 4.471500e-02 : f32
    %379 = vector.broadcast %cst_220 : f32 to vector<16x64xf32>
    %380 = arith.mulf %379, %378 : vector<16x64xf32>
    %381 = arith.addf %376, %380 : vector<16x64xf32>
    %cst_221 = arith.constant 0.797884583 : f32
    %382 = vector.broadcast %cst_221 : f32 to vector<16x64xf32>
    %383 = arith.mulf %382, %381 : vector<16x64xf32>
    %384 = math.tanh %383 : vector<16x64xf32>
    %cst_222 = arith.constant 1.000000e+00 : f32
    %385 = vector.broadcast %cst_222 : f32 to vector<16x64xf32>
    %386 = arith.addf %385, %384 : vector<16x64xf32>
    %cst_223 = arith.constant 5.000000e-01 : f32
    %387 = vector.broadcast %cst_223 : f32 to vector<16x64xf32>
    %388 = arith.mulf %387, %386 : vector<16x64xf32>
    %389 = arith.mulf %376, %388 : vector<16x64xf32>
    %390 = arith.truncf %389 : vector<16x64xf32> to vector<16x64xbf16>
    %c1_224 = arith.constant 1 : index
    %c0_225 = arith.constant 0 : index
    %c0_226 = arith.constant 0 : index
    %391 = vector.load %arg6[%c1_224, %c0_225, %c0_226] : memref<2x64x32xbf16, #tpu.memory_space<vmem>>, vector<1x64x32xbf16>
    %392 = vector.shape_cast %391 : vector<1x64x32xbf16> to vector<64x32xbf16>
    %cst_227 = arith.constant dense<0.000000e+00> : vector<16x32xf32>
    %393 = tpu.matmul %390, %392, %cst_227 {dimension_numbers = #tpu.dot_dimension_numbers<[1], [0], [0], [1], [0, 0, 1, 1], [], []>} : vector<16x64xbf16>, vector<64x32xbf16>, vector<16x32xf32> -> vector<16x32xf32>
    %c1_228 = arith.constant 1 : index
    %c10_229 = arith.constant 10 : index
    %c0_230 = arith.constant 0 : index
    %394 = vector.load %arg7[%c1_228, %c10_229, %c0_230] : memref<2x13x128xf32, #tpu.memory_space<vmem>>, vector<1x1x32xf32>
    %395 = vector.shape_cast %394 : vector<1x1x32xf32> to vector<1x32xf32>
    %396 = vector.broadcast %395 : vector<1x32xf32> to vector<16x32xf32>
    %397 = arith.addf %393, %396 : vector<16x32xf32>
    %398 = arith.addf %368, %397 : vector<16x32xf32>
    %c1_231 = arith.constant 1 : index
    %c11_232 = arith.constant 11 : index
    %c0_233 = arith.constant 0 : index
    %399 = vector.load %arg7[%c1_231, %c11_232, %c0_233] : memref<2x13x128xf32, #tpu.memory_space<vmem>>, vector<1x1x32xf32>
    %400 = vector.shape_cast %399 : vector<1x1x32xf32> to vector<1x32xf32>
    %c1_234 = arith.constant 1 : index
    %c12_235 = arith.constant 12 : index
    %c0_236 = arith.constant 0 : index
    %401 = vector.load %arg7[%c1_234, %c12_235, %c0_236] : memref<2x13x128xf32, #tpu.memory_space<vmem>>, vector<1x1x32xf32>
    %402 = vector.shape_cast %401 : vector<1x1x32xf32> to vector<1x32xf32>
    %cst_237 = arith.constant dense<0.000000e+00> : vector<16xf32>
    %403 = vector.multi_reduction <add>, %398, %cst_237 [1] : vector<16x32xf32> to vector<16xf32>
    %404 = vector.shape_cast %403 : vector<16xf32> to vector<16x1xf32>
    %cst_238 = arith.constant 3.200000e+01 : f32
    %405 = vector.broadcast %cst_238 : f32 to vector<16x1xf32>
    %406 = arith.divf %404, %405 : vector<16x1xf32>
    %407 = vector.broadcast %406 : vector<16x1xf32> to vector<16x32xf32>
    %408 = arith.subf %398, %407 : vector<16x32xf32>
    %409 = arith.mulf %408, %408 : vector<16x32xf32>
    %cst_239 = arith.constant dense<0.000000e+00> : vector<16xf32>
    %410 = vector.multi_reduction <add>, %409, %cst_239 [1] : vector<16x32xf32> to vector<16xf32>
    %411 = vector.shape_cast %410 : vector<16xf32> to vector<16x1xf32>
    %cst_240 = arith.constant 3.200000e+01 : f32
    %412 = vector.broadcast %cst_240 : f32 to vector<16x1xf32>
    %413 = arith.divf %411, %412 : vector<16x1xf32>
    %414 = vector.broadcast %406 : vector<16x1xf32> to vector<16x32xf32>
    %415 = arith.subf %398, %414 : vector<16x32xf32>
    %cst_241 = arith.constant 9.99999996E-13 : f32
    %416 = vector.broadcast %cst_241 : f32 to vector<16x1xf32>
    %417 = arith.addf %413, %416 : vector<16x1xf32>
    %418 = math.rsqrt %417 : vector<16x1xf32>
    %419 = vector.broadcast %418 : vector<16x1xf32> to vector<16x32xf32>
    %420 = arith.mulf %415, %419 : vector<16x32xf32>
    %421 = vector.broadcast %400 : vector<1x32xf32> to vector<16x32xf32>
    %422 = arith.mulf %420, %421 : vector<16x32xf32>
    %423 = vector.broadcast %402 : vector<1x32xf32> to vector<16x32xf32>
    %424 = arith.addf %422, %423 : vector<16x32xf32>
    %425 = vector.shape_cast %424 : vector<16x32xf32> to vector<2x8x32xf32>
    %426 = vector.extract_strided_slice %425 {offsets = [0, 0, 0], sizes = [2, 1, 32], strides = [1, 1, 1]} : vector<2x8x32xf32> to vector<2x1x32xf32>
    %427 = vector.shape_cast %426 : vector<2x1x32xf32> to vector<2x32xf32>
    %428 = arith.truncf %427 : vector<2x32xf32> to vector<2x32xbf16>
    %c0_242 = arith.constant 0 : index
    %c0_243 = arith.constant 0 : index
    %c0_244 = arith.constant 0 : index
    %429 = vector.load %arg9[%c0_242, %c0_243, %c0_244] : memref<2x32x32xbf16, #tpu.memory_space<vmem>>, vector<1x32x32xbf16>
    %430 = vector.shape_cast %429 : vector<1x32x32xbf16> to vector<32x32xbf16>
    %cst_245 = arith.constant dense<0.000000e+00> : vector<2x32xf32>
    %431 = tpu.matmul %428, %430, %cst_245 {dimension_numbers = #tpu.dot_dimension_numbers<[1], [0], [0], [1], [0, 0, 1, 1], [], []>} : vector<2x32xbf16>, vector<32x32xbf16>, vector<2x32xf32> -> vector<2x32xf32>
    %c2_246 = arith.constant 2 : index
    %c0_247 = arith.constant 0 : index
    %432 = vector.load %arg8[%c2_246, %c0_247] : memref<4x128xf32, #tpu.memory_space<vmem>>, vector<1x32xf32>
    %433 = vector.broadcast %432 : vector<1x32xf32> to vector<2x32xf32>
    %434 = arith.addf %431, %433 : vector<2x32xf32>
    %435 = math.tanh %434 : vector<2x32xf32>
    %436 = arith.truncf %435 : vector<2x32xf32> to vector<2x32xbf16>
    %c1_248 = arith.constant 1 : index
    %c0_249 = arith.constant 0 : index
    %c0_250 = arith.constant 0 : index
    %437 = vector.load %arg9[%c1_248, %c0_249, %c0_250] : memref<2x32x32xbf16, #tpu.memory_space<vmem>>, vector<1x32x32xbf16>
    %438 = vector.shape_cast %437 : vector<1x32x32xbf16> to vector<32x32xbf16>
    %cst_251 = arith.constant dense<0.000000e+00> : vector<2x32xf32>
    %439 = tpu.matmul %436, %438, %cst_251 {dimension_numbers = #tpu.dot_dimension_numbers<[1], [0], [0], [1], [0, 0, 1, 1], [], []>} : vector<2x32xbf16>, vector<32x32xbf16>, vector<2x32xf32> -> vector<2x32xf32>
    %440 = vector.extract_strided_slice %439 {offsets = [0, 0], sizes = [2, 3], strides = [1, 1]} : vector<2x32xf32> to vector<2x3xf32>
    %c3_252 = arith.constant 3 : index
    %c0_253 = arith.constant 0 : index
    %441 = vector.load %arg8[%c3_252, %c0_253] : memref<4x128xf32, #tpu.memory_space<vmem>>, vector<1x3xf32>
    %442 = vector.broadcast %441 : vector<1x3xf32> to vector<2x3xf32>
    %443 = arith.addf %440, %442 : vector<2x3xf32>
    %c0_254 = arith.constant 0 : index
    %c0_255 = arith.constant 0 : index
    %444 = vector.load %arg10[%c0_254, %c0_255] : memref<2x3xf32, #tpu.memory_space<vmem>>, vector<2x3xf32>
    tpu.vector_store %arg10[%c0_254, %c0_255], %443 {strides = array<i32>} : memref<2x3xf32, #tpu.memory_space<vmem>>, vector<2x3xf32>,
    return
  }
}

</mosaic_0001>

<llo_original>
// kernel: tpu_custom_call.1
$region0: #{tpu_custom_call.1}
  #allocation0 [shape = 'u32[]', space=smem, size = 0x4, offset = 0x4, fixed_abs, tag = 'smem constant byte address 0x4 - core index']
  #allocation1 [shape = 'u32[72,128]{1,0:T(1,128)}', space=vmem, size = 0x9000, scoped, tag = 'internal scratch']
  %s0 = inlined_call_operand.vmem [shape: s32[16,3], index: 0, kind: input, shape index: {}]
  %s1 = inlined_call_operand.vmem [shape: f32[2,8], index: 1, kind: input, shape index: {}]
  %s2 = inlined_call_operand.vmem [shape: bf16[128,32], index: 2, kind: input, shape index: {}]
  %s3 = inlined_call_operand.vmem [shape: bf16[2,2,3,32,16], index: 3, kind: input, shape index: {}]
  %s4 = inlined_call_operand.vmem [shape: bf16[2,2,16,32], index: 4, kind: input, shape index: {}]
  %s5 = inlined_call_operand.vmem [shape: bf16[2,32,64], index: 5, kind: input, shape index: {}]
  %s6 = inlined_call_operand.vmem [shape: bf16[2,64,32], index: 6, kind: input, shape index: {}]
  %s7 = inlined_call_operand.vmem [shape: f32[2,13,128], index: 7, kind: input, shape index: {}]
  %s8 = inlined_call_operand.vmem [shape: f32[4,128], index: 8, kind: input, shape index: {}]
  %s9 = inlined_call_operand.vmem [shape: bf16[2,32,32], index: 9, kind: input, shape index: {}]
  %s10 = inlined_call_operand.hbm [shape: f32[2,3], index: 10, kind: output, shape index: {}]
  %s11 = sld [smem:[#allocation0]]
  $region50: #{tpu_custom_call.1} parent=0
    _
  %s13 = ssub.s32 1, %s11
  %s14 = scalar_select 0, %s13, %s11
  $region1: #{tpu_custom_call.1} parent=0
    #allocation2 [shape = 'u8[1024]{0}', space=vmem, size = 0x400, scoped, tag = 'output window, operand 0, single buffered']
    #allocation3 [shape = 's32[1]{0}', space=sflag, size = 0x4, scoped, tag = 'scoped memory for tpu_custom_call.1']
    %15 = vsyncpa [#allocation3], 0
    // Predicated region
    $region2: #{tpu_custom_call.1} parent=1 // pred_check
      _
    $region3: #{tpu_custom_call.1} parent=1 // pred_check_branch
      %17 = sbr.rel (0) target = $region5
    $region4: #{tpu_custom_call.1} parent=1 // pred_region
      _
    $region5: #{tpu_custom_call.1} parent=1 // pred_fallthru
      _
    // Predicated region
    $region6: #{tpu_custom_call.1} parent=1 // pred_check
      _
    $region7: #{tpu_custom_call.1} parent=1 // pred_check_branch
      %19 = sbr.rel (0) target = $region9
    $region8: #{tpu_custom_call.1} parent=1 // pred_region
      _
    $region9: #{tpu_custom_call.1} parent=1 // pred_fallthru
      _
    // Predicated region
    $region10: #{tpu_custom_call.1} parent=1 // pred_check
      _
    $region11: #{tpu_custom_call.1} parent=1 // pred_check_branch
      %21 = sbr.rel (0) target = $region13
    $region12: #{tpu_custom_call.1} parent=1 // pred_region
      _
    $region13: #{tpu_custom_call.1} parent=1 // pred_fallthru
      _
    // Predicated region
    $region14: #{tpu_custom_call.1} parent=1 // pred_check
      _
    $region15: #{tpu_custom_call.1} parent=1 // pred_check_branch
      %23 = sbr.rel (0) target = $region17
    $region16: #{tpu_custom_call.1} parent=1 // pred_region
      _
    $region17: #{tpu_custom_call.1} parent=1 // pred_fallthru
      _
    // Predicated region
    $region18: #{tpu_custom_call.1} parent=1 // pred_check
      _
    $region19: #{tpu_custom_call.1} parent=1 // pred_check_branch
      %25 = sbr.rel (0) target = $region21
    $region20: #{tpu_custom_call.1} parent=1 // pred_region
      _
    $region21: #{tpu_custom_call.1} parent=1 // pred_fallthru
      _
    // Predicated region
    $region22: #{tpu_custom_call.1} parent=1 // pred_check
      _
    $region23: #{tpu_custom_call.1} parent=1 // pred_check_branch
      %27 = sbr.rel (0) target = $region25
    $region24: #{tpu_custom_call.1} parent=1 // pred_region
      _
    $region25: #{tpu_custom_call.1} parent=1 // pred_fallthru
      _
    // Predicated region
    $region26: #{tpu_custom_call.1} parent=1 // pred_check
      _
    $region27: #{tpu_custom_call.1} parent=1 // pred_check_branch
      %29 = sbr.rel (0) target = $region29
    $region28: #{tpu_custom_call.1} parent=1 // pred_region
      _
    $region29: #{tpu_custom_call.1} parent=1 // pred_fallthru
      _
    // Predicated region
    $region30: #{tpu_custom_call.1} parent=1 // pred_check
      _
    $region31: #{tpu_custom_call.1} parent=1 // pred_check_branch
      %31 = sbr.rel (0) target = $region33
    $region32: #{tpu_custom_call.1} parent=1 // pred_region
      _
    $region33: #{tpu_custom_call.1} parent=1 // pred_fallthru
      _
    // Predicated region
    $region34: #{tpu_custom_call.1} parent=1 // pred_check
      _
    $region35: #{tpu_custom_call.1} parent=1 // pred_check_branch
      %33 = sbr.rel (0) target = $region37
    $region36: #{tpu_custom_call.1} parent=1 // pred_region
      _
    $region37: #{tpu_custom_call.1} parent=1 // pred_fallthru
      _
    // Predicated region
    $region38: #{tpu_custom_call.1} parent=1 // pred_check
      _
    $region39: #{tpu_custom_call.1} parent=1 // pred_check_branch
      %35 = sbr.rel (0) target = $region41
    $region40: #{tpu_custom_call.1} parent=1 // pred_region
      _
    $region41: #{tpu_custom_call.1} parent=1 // pred_fallthru
      _
    %v37 = vlaneseq
    %v38 = vand.u32 %v37, 127
    %v39 = vld [vmem:[%s0] sm:$0xff]
    %v40 = vld [vmem:[%s0 + $0x8] sm:$0xff]
    %41 = vset.pattern.permute.xlu0 0
    %42 = vperm.xlu0 %41, %v39
    %v43 = vpop.permute.xlu0 %42
    %44 = vset.pattern.permute.xlu0 0
    %45 = vperm.xlu0 %44, %v40
    %v46 = vpop.permute.xlu0 %45
    %vm47 = vcmp.eq.s32.totalorder %v38, %v43
    %vm48 = vcmp.eq.s32.totalorder %v38, %v46
    %49 = vset.pattern.permute.xlu0 1
    %50 = vperm.xlu0 %49, %v39
    %v51 = vpop.permute.xlu0 %50
    %52 = vset.pattern.permute.xlu0 1
    %53 = vperm.xlu0 %52, %v40
    %v54 = vpop.permute.xlu0 %53
    %vm55 = vcmp.eq.s32.totalorder %v38, %v51
    %vm56 = vcmp.eq.s32.totalorder %v38, %v54
    %vm57 = vmor %vm47, %vm55
    %vm58 = vmor %vm48, %vm56
    %59 = vset.pattern.permute.xlu0 2
    %60 = vperm.xlu0 %59, %v39
    %v61 = vpop.permute.xlu0 %60
    %62 = vset.pattern.permute.xlu0 2
    %63 = vperm.xlu0 %62, %v40
    %v64 = vpop.permute.xlu0 %63
    %vm65 = vcmp.eq.s32.totalorder %v38, %v61
    %vm66 = vcmp.eq.s32.totalorder %v38, %v64
    %vm67 = vmor %vm57, %vm65
    %vm68 = vmor %vm58, %vm66
    %v69 = vsel %vm67, 1.0, 0.0
    %v70 = vsel %vm68, 1.0, 0.0
    %v71 = vpack.c.bf16 %v70, %v69
    %v72 = vld [vmem:[%s2] sm:$0xf]
    %v73 = vld [vmem:[%s2 + $0x4] sm:$0xf]
    %v74 = vld [vmem:[%s2 + $0x8] sm:$0xf]
    %v75 = vld [vmem:[%s2 + $0xc] sm:$0xf]
    %v76 = vld [vmem:[%s2 + $0x10] sm:$0xf]
    %v77 = vld [vmem:[%s2 + $0x14] sm:$0xf]
    %v78 = vld [vmem:[%s2 + $0x18] sm:$0xf]
    %v79 = vld [vmem:[%s2 + $0x1c] sm:$0xf]
    %v80 = vld [vmem:[%s2 + $0x20] sm:$0xf]
    %v81 = vld [vmem:[%s2 + $0x24] sm:$0xf]
    %v82 = vld [vmem:[%s2 + $0x28] sm:$0xf]
    %v83 = vld [vmem:[%s2 + $0x2c] sm:$0xf]
    %v84 = vld [vmem:[%s2 + $0x30] sm:$0xf]
    %v85 = vld [vmem:[%s2 + $0x34] sm:$0xf]
    %v86 = vld [vmem:[%s2 + $0x38] sm:$0xf]
    %v87 = vld [vmem:[%s2 + $0x3c] sm:$0xf]
    %v104 = vunpack.c.l.b16 %v72
    %v105 = vunpack.c.l.b16 %v73
    %v106 = vunpack.c.l.b16 %v74
    %v107 = vunpack.c.l.b16 %v75
    %v108 = vunpack.c.l.b16 %v76
    %v109 = vunpack.c.l.b16 %v77
    %v110 = vunpack.c.l.b16 %v78
    %v111 = vunpack.c.l.b16 %v79
    %v112 = vunpack.c.l.b16 %v80
    %v113 = vunpack.c.l.b16 %v81
    %v114 = vunpack.c.l.b16 %v82
    %v115 = vunpack.c.l.b16 %v83
    %v116 = vunpack.c.l.b16 %v84
    %v117 = vunpack.c.l.b16 %v85
    %v118 = vunpack.c.l.b16 %v86
    %v119 = vunpack.c.l.b16 %v87
    %v120 = vpack.c.b16 %v105, %v104
    %v121 = vpack.c.b16 %v107, %v106
    %v122 = vpack.c.b16 %v109, %v108
    %v123 = vpack.c.b16 %v111, %v110
    %v124 = vpack.c.b16 %v113, %v112
    %v125 = vpack.c.b16 %v115, %v114
    %v126 = vpack.c.b16 %v117, %v116
    %v127 = vpack.c.b16 %v119, %v118
    %136 = vmatpush.bf16.msra.mxu0 %v127
    %137 = vmatpush.bf16.msra.mxu0 %v126
    %138 = vmatpush.bf16.msra.mxu0 %v125
    %139 = vmatpush.bf16.msra.mxu0 %v124
    %140 = vmatpush.bf16.msra.mxu0 %v123
    %141 = vmatpush.bf16.msra.mxu0 %v122
    %142 = vmatpush.bf16.msra.mxu0 %v121
    %143 = vmatpush.bf16.msra.mxu0 %v120
    %144 = vmatmul.bf16.gmra.mxu0 %v71
    %v145 = vpop.f32.mrf.mxu0
    %v146 = vadd.f32 0.0, %v145
    %v147 = vpop.f32.mrf.mxu0
    %v148 = vadd.f32 0.0, %v147
    %149 = vdwg.mxu0
    %v150 = vld [vmem:[%s8] sm:$0x1]
    %v151 = vld [vmem:[%s8 + $0x1] sm:$0x1]
    %vm152 = vcmask 261120
    %v153 = vsel %vm152, %v146, 0.0
    %154 = vadd.xlane.f32.xlu0 %v153
    %v155 = vpop.xlane.xlu0 %154
    %v156 = vsel %vm152, %v148, 0.0
    %157 = vadd.xlane.f32.xlu0 %v156
    %v158 = vpop.xlane.xlu0 %157
    %v159 = vrcp.pop 32.0
    %v160 = vmul.f32 32.0, %v159
    %v161 = vsub.f32 1.0, %v160
    %v162 = vmul.f32 %v159, %v161
    %v163 = vadd.f32 %v159, %v162
    %vm164 = vweird.f32 %v159
    %v165 = vsel %vm164, %v159, %v163
    %v166 = vmul.f32 %v155, %v165
    %v167 = vmul.f32 %v158, %v165
    %v168 = vsub.f32 %v146, %v166
    %v169 = vsub.f32 %v148, %v167
    %v170 = vmul.f32 %v168, %v168
    %v171 = vmul.f32 %v169, %v169
    %v172 = vsel %vm152, %v170, 0.0
    %173 = vadd.xlane.f32.xlu0 %v172
    %v174 = vpop.xlane.xlu0 %173
    %v175 = vsel %vm152, %v171, 0.0
    %176 = vadd.xlane.f32.xlu0 %v175
    %v177 = vpop.xlane.xlu0 %176
    %v178 = vmul.f32 %v174, %v165
    %v179 = vmul.f32 %v177, %v165
    %v180 = vadd.f32 %v178, 1e-12
    %v181 = vadd.f32 %v179, 1e-12
    %v182 = vrsqrt.pop %v180
    %v183 = vmul.f32 %v182, %v180
    %v184 = vmul.f32 %v183, %v182
    %v185 = vmul.f32 0.5, %v184
    %v186 = vsub.f32 1.5, %v185
    %v187 = vmul.f32 %v182, %v186
    %vm188 = vweird.f32 %v180
    %vm189 = vweird.f32 %v182
    %vm190 = vmor %vm188, %vm189
    %v191 = vsel %vm190, %v182, %v187
    %v192 = vrsqrt.pop %v181
    %v193 = vmul.f32 %v192, %v181
    %v194 = vmul.f32 %v193, %v192
    %v195 = vmul.f32 0.5, %v194
    %v196 = vsub.f32 1.5, %v195
    %v197 = vmul.f32 %v192, %v196
    %vm198 = vweird.f32 %v181
    %vm199 = vweird.f32 %v192
    %vm200 = vmor %vm198, %vm199
    %v201 = vsel %vm200, %v192, %v197
    %v202 = vmul.f32 %v168, %v191
    %v203 = vmul.f32 %v169, %v201
    %v204 = vperm.slane %v150, 0
    %v205 = vmul.f32 %v202, %v204
    %v206 = vmul.f32 %v203, %v204
    %v207 = vperm.slane %v151, 0
    %v208 = vadd.f32 %v205, %v207
    %v209 = vadd.f32 %v206, %v207
    %v210 = vld [vmem:[%s1] sm:$0x3]
    %v211 = vsub.f32 1.0, %v210
    %v212 = vmul.f32 %v211, -10000.0
    %v214 = vrot.slane %v212, 1
    %v215 = vperm.slane %v212, 0
    %v216 = vperm.slane %v214, 0
    %v219 = vpack.c.bf16 %v209, %v208
    %v220 = vld [vmem:[%s3] sm:$0xf]
    %v221 = vld [vmem:[%s3 + $0x4] sm:$0xf]
    %v222 = vld [vmem:[%s3 + $0x8] sm:$0xf]
    %v223 = vld [vmem:[%s3 + $0xc] sm:$0xf]
    %v224 = vld [vmem:[%s7] sm:$0x1]
    %v225 = vperm.slane %v224, 0
    %v230 = vunpack.c.l.b16 %v220
    %v231 = vunpack.c.l.b16 %v221
    %v232 = vunpack.c.l.b16 %v222
    %v233 = vunpack.c.l.b16 %v223
    %v234 = vpack.c.b16 %v231, %v230
    %v235 = vpack.c.b16 %v233, %v232
    %v239 = vsel %vm152, %v219, 0
    %241 = vmatpush.bf16.msra.mxu0 0
    %242 = vmatpush.bf16.msra.mxu0 0
    %243 = vmatpush.bf16.msra.mxu0 0
    %244 = vmatpush.bf16.msra.mxu0 0
    %245 = vmatpush.bf16.msra.mxu0 0
    %246 = vmatpush.bf16.msra.mxu0 0
    %247 = vmatpush.bf16.msra.mxu0 %v235
    %248 = vmatpush.bf16.msra.mxu0 %v234
    %249 = vmatmul.bf16.gmra.mxu0 %v239
    %v250 = vpop.f32.mrf.mxu0
    %v251 = vadd.f32 %v225, %v250
    %v252 = vpop.f32.mrf.mxu0
    %v253 = vadd.f32 %v225, %v252
    %254 = vdwg.mxu0
    %v255 = vpack.c.bf16 %v251, %v251
    %v256 = vpack.c.bf16 %v253, %v253
    %s257 = scalar_lea.vmem %s3, 16
    %v258 = vld [vmem:[%s257] sm:$0xf]
    %v259 = vld [vmem:[%s257 + $0x4] sm:$0xf]
    %v260 = vld [vmem:[%s257 + $0x8] sm:$0xf]
    %v261 = vld [vmem:[%s257 + $0xc] sm:$0xf]
    %v262 = vld [vmem:[%s7 + $0x1] sm:$0x1]
    %v263 = vperm.slane %v262, 0
    %v268 = vunpack.c.l.b16 %v258
    %v269 = vunpack.c.l.b16 %v259
    %v270 = vunpack.c.l.b16 %v260
    %v271 = vunpack.c.l.b16 %v261
    %v272 = vpack.c.b16 %v269, %v268
    %v273 = vpack.c.b16 %v271, %v270
    %276 = vmatpush.bf16.msra.mxu0 0
    %277 = vmatpush.bf16.msra.mxu0 0
    %278 = vmatpush.bf16.msra.mxu0 0
    %279 = vmatpush.bf16.msra.mxu0 0
    %280 = vmatpush.bf16.msra.mxu0 0
    %281 = vmatpush.bf16.msra.mxu0 0
    %282 = vmatpush.bf16.msra.mxu0 %v273
    %283 = vmatpush.bf16.msra.mxu0 %v272
    %284 = vmatmul.bf16.gmra.mxu0 %v239
    %v285 = vpop.f32.mrf.mxu0
    %v286 = vadd.f32 %v263, %v285
    %v287 = vpop.f32.mrf.mxu0
    %v288 = vadd.f32 %v263, %v287
    %289 = vdwg.mxu0
    %v290 = vpack.c.bf16 %v286, %v286
    %v291 = vpack.c.bf16 %v288, %v288
    %s292 = scalar_lea.vmem %s3, 32
    %v293 = vld [vmem:[%s292] sm:$0xf]
    %v294 = vld [vmem:[%s292 + $0x4] sm:$0xf]
    %v295 = vld [vmem:[%s292 + $0x8] sm:$0xf]
    %v296 = vld [vmem:[%s292 + $0xc] sm:$0xf]
    %v297 = vld [vmem:[%s7 + $0x2] sm:$0x1]
    %v298 = vperm.slane %v297, 0
    %v303 = vunpack.c.l.b16 %v293
    %v304 = vunpack.c.l.b16 %v294
    %v305 = vunpack.c.l.b16 %v295
    %v306 = vunpack.c.l.b16 %v296
    %v307 = vpack.c.b16 %v304, %v303
    %v308 = vpack.c.b16 %v306, %v305
    %311 = vmatpush.bf16.msra.mxu0 0
    %312 = vmatpush.bf16.msra.mxu0 0
    %313 = vmatpush.bf16.msra.mxu0 0
    %314 = vmatpush.bf16.msra.mxu0 0
    %315 = vmatpush.bf16.msra.mxu0 0
    %316 = vmatpush.bf16.msra.mxu0 0
    %317 = vmatpush.bf16.msra.mxu0 %v308
    %318 = vmatpush.bf16.msra.mxu0 %v307
    %319 = vmatmul.bf16.gmra.mxu0 %v239
    %v320 = vpop.f32.mrf.mxu0
    %v321 = vadd.f32 %v298, %v320
    %v322 = vpop.f32.mrf.mxu0
    %v323 = vadd.f32 %v298, %v322
    %324 = vdwg.mxu0
    %v325 = vpack.c.bf16 %v321, %v321
    %v326 = vpack.c.bf16 %v323, %v323
    %vm327 = vcmask 130048
    %v329 = vsel %vm327, %v255, 0
    %v332 = vsel %vm327, %v290, 0
    %334 = vmatpush.bf16.xpose.msra.mxu0 0
    %335 = vmatpush.bf16.xpose.msra.mxu0 0
    %336 = vmatpush.bf16.xpose.msra.mxu0 0
    %337 = vmatpush.bf16.xpose.msra.mxu0 0
    %338 = vmatpush.bf16.xpose.msra.mxu0 0
    %339 = vmatpush.bf16.xpose.msra.mxu0 0
    %340 = vmatpush.bf16.xpose.msra.mxu0 0
    %341 = vmatpush.bf16.xpose.msra.mxu0 %v332
    %342 = vmatmul.bf16.gmra.mxu0 %v329
    %v343 = vpop.f32.mrf.mxu0
    %v344 = vadd.f32 0.0, %v343
    %v345 = vpop.f32.mrf.mxu0
    %346 = vdwg.mxu0
    %v348 = vsel %vm327, %v256, 0
    %v351 = vsel %vm327, %v291, 0
    %353 = vmatpush.bf16.xpose.msra.mxu0 0
    %354 = vmatpush.bf16.xpose.msra.mxu0 0
    %355 = vmatpush.bf16.xpose.msra.mxu0 0
    %356 = vmatpush.bf16.xpose.msra.mxu0 0
    %357 = vmatpush.bf16.xpose.msra.mxu0 0
    %358 = vmatpush.bf16.xpose.msra.mxu0 0
    %359 = vmatpush.bf16.xpose.msra.mxu0 0
    %360 = vmatpush.bf16.xpose.msra.mxu0 %v351
    %361 = vmatmul.bf16.gmra.mxu0 %v348
    %v362 = vpop.f32.mrf.mxu0
    %v363 = vadd.f32 0.0, %v362
    %v364 = vpop.f32.mrf.mxu0
    %365 = vdwg.mxu0
    %v366 = vmul.f32 %v344, 0.25
    %v367 = vmul.f32 %v363, 0.25
    %v368 = vadd.f32 %v366, %v215
    %v369 = vadd.f32 %v367, %v216
    %vm370 = vcmask 64512
    %v371 = vsel %vm370, %v368, -inf
    %372 = vmax.xlane.f32.xlu0 %v371
    %v373 = vpop.xlane.xlu0 %372
    %v374 = vsel %vm370, %v369, -inf
    %375 = vmax.xlane.f32.xlu0 %v374
    %v376 = vpop.xlane.xlu0 %375
    %v377 = vsub.f32 %v368, %v373
    %v378 = vsub.f32 %v369, %v376
    %v379 = vmul.f32 %v377, 1.442695
    %v380 = vpow.pop %v379
    %v381 = vmul.f32 %v378, 1.442695
    %v382 = vpow.pop %v381
    %v383 = vsel %vm370, %v380, 0.0
    %384 = vadd.xlane.f32.xlu0 %v383
    %v385 = vpop.xlane.xlu0 %384
    %v386 = vsel %vm370, %v382, 0.0
    %387 = vadd.xlane.f32.xlu0 %v386
    %v388 = vpop.xlane.xlu0 %387
    %v389 = vrcp.pop %v385
    %v390 = vrcp.pop %v388
    %v391 = vmul.f32 %v380, %v389
    %v392 = vmul.f32 %v382, %v390
    %v393 = vpack.c.bf16 %v391, %v391
    %v394 = vpack.c.bf16 %v392, %v392
    %v396 = vsel %vm370, %v393, 0
    %vm398 = vcmask 1043456
    %v400 = vsel %vm398, %v325, 0
    %402 = vmatpush.bf16.msra.mxu0 0
    %403 = vmatpush.bf16.msra.mxu0 0
    %404 = vmatpush.bf16.msra.mxu0 0
    %405 = vmatpush.bf16.msra.mxu0 0
    %406 = vmatpush.bf16.msra.mxu0 0
    %407 = vmatpush.bf16.msra.mxu0 0
    %408 = vmatpush.bf16.msra.mxu0 0
    %409 = vmatpush.bf16.msra.mxu0 %v400
    %410 = vmatmul.bf16.gmra.mxu0 %v396
    %v411 = vpop.f32.mrf.mxu0
    %v412 = vadd.f32 0.0, %v411
    %v413 = vpop.f32.mrf.mxu0
    %414 = vdwg.mxu0
    %v416 = vsel %vm370, %v394, 0
    %v419 = vsel %vm398, %v326, 0
    %421 = vmatpush.bf16.msra.mxu0 0
    %422 = vmatpush.bf16.msra.mxu0 0
    %423 = vmatpush.bf16.msra.mxu0 0
    %424 = vmatpush.bf16.msra.mxu0 0
    %425 = vmatpush.bf16.msra.mxu0 0
    %426 = vmatpush.bf16.msra.mxu0 0
    %427 = vmatpush.bf16.msra.mxu0 0
    %428 = vmatpush.bf16.msra.mxu0 %v419
    %429 = vmatmul.bf16.gmra.mxu0 %v416
    %v430 = vpop.f32.mrf.mxu0
    %v431 = vadd.f32 0.0, %v430
    %v432 = vpop.f32.mrf.mxu0
    %433 = vdwg.mxu0
    %v434 = vpack.c.bf16 %v431, %v412
    %v435 = vld [vmem:[%s4] sm:$0xf]
    %v436 = vld [vmem:[%s4 + $0x4] sm:$0xf]
    %s437 = scalar_lea.vmem %s3, 48
    %v438 = vld [vmem:[%s437] sm:$0xf]
    %v439 = vld [vmem:[%s437 + $0x4] sm:$0xf]
    %v440 = vld [vmem:[%s437 + $0x8] sm:$0xf]
    %v441 = vld [vmem:[%s437 + $0xc] sm:$0xf]
    %v442 = vld [vmem:[%s7 + $0x3] sm:$0x1]
    %v443 = vperm.slane %v442, 0
    %v448 = vunpack.c.l.b16 %v438
    %v449 = vunpack.c.l.b16 %v439
    %v450 = vunpack.c.l.b16 %v440
    %v451 = vunpack.c.l.b16 %v441
    %v452 = vpack.c.b16 %v449, %v448
    %v453 = vpack.c.b16 %v451, %v450
    %456 = vmatpush.bf16.msra.mxu0 0
    %457 = vmatpush.bf16.msra.mxu0 0
    %458 = vmatpush.bf16.msra.mxu0 0
    %459 = vmatpush.bf16.msra.mxu0 0
    %460 = vmatpush.bf16.msra.mxu0 0
    %461 = vmatpush.bf16.msra.mxu0 0
    %462 = vmatpush.bf16.msra.mxu0 %v453
    %463 = vmatpush.bf16.msra.mxu0 %v452
    %464 = vmatmul.bf16.gmra.mxu0 %v239
    %v465 = vpop.f32.mrf.mxu0
    %v466 = vadd.f32 %v443, %v465
    %v467 = vpop.f32.mrf.mxu0
    %v468 = vadd.f32 %v443, %v467
    %469 = vdwg.mxu0
    %v470 = vpack.c.bf16 %v466, %v466
    %v471 = vpack.c.bf16 %v468, %v468
    %s472 = scalar_lea.vmem %s3, 64
    %v473 = vld [vmem:[%s472] sm:$0xf]
    %v474 = vld [vmem:[%s472 + $0x4] sm:$0xf]
    %v475 = vld [vmem:[%s472 + $0x8] sm:$0xf]
    %v476 = vld [vmem:[%s472 + $0xc] sm:$0xf]
    %v477 = vld [vmem:[%s7 + $0x4] sm:$0x1]
    %v478 = vperm.slane %v477, 0
    %v483 = vunpack.c.l.b16 %v473
    %v484 = vunpack.c.l.b16 %v474
    %v485 = vunpack.c.l.b16 %v475
    %v486 = vunpack.c.l.b16 %v476
    %v487 = vpack.c.b16 %v484, %v483
    %v488 = vpack.c.b16 %v486, %v485
    %491 = vmatpush.bf16.msra.mxu0 0
    %492 = vmatpush.bf16.msra.mxu0 0
    %493 = vmatpush.bf16.msra.mxu0 0
    %494 = vmatpush.bf16.msra.mxu0 0
    %495 = vmatpush.bf16.msra.mxu0 0
    %496 = vmatpush.bf16.msra.mxu0 0
    %497 = vmatpush.bf16.msra.mxu0 %v488
    %498 = vmatpush.bf16.msra.mxu0 %v487
    %499 = vmatmul.bf16.gmra.mxu0 %v239
    %v500 = vpop.f32.mrf.mxu0
    %v501 = vadd.f32 %v478, %v500
    %v502 = vpop.f32.mrf.mxu0
    %v503 = vadd.f32 %v478, %v502
    %504 = vdwg.mxu0
    %v505 = vpack.c.bf16 %v501, %v501
    %v506 = vpack.c.bf16 %v503, %v503
    %s507 = scalar_lea.vmem %s3, 80
    %v508 = vld [vmem:[%s507] sm:$0xf]
    %v509 = vld [vmem:[%s507 + $0x4] sm:$0xf]
    %v510 = vld [vmem:[%s507 + $0x8] sm:$0xf]
    %v511 = vld [vmem:[%s507 + $0xc] sm:$0xf]
    %v512 = vld [vmem:[%s7 + $0x5] sm:$0x1]
    %v513 = vperm.slane %v512, 0
    %v518 = vunpack.c.l.b16 %v508
    %v519 = vunpack.c.l.b16 %v509
    %v520 = vunpack.c.l.b16 %v510
    %v521 = vunpack.c.l.b16 %v511
    %v522 = vpack.c.b16 %v519, %v518
    %v523 = vpack.c.b16 %v521, %v520
    %526 = vmatpush.bf16.msra.mxu0 0
    %527 = vmatpush.bf16.msra.mxu0 0
    %528 = vmatpush.bf16.msra.mxu0 0
    %529 = vmatpush.bf16.msra.mxu0 0
    %530 = vmatpush.bf16.msra.mxu0 0
    %531 = vmatpush.bf16.msra.mxu0 0
    %532 = vmatpush.bf16.msra.mxu0 %v523
    %533 = vmatpush.bf16.msra.mxu0 %v522
    %534 = vmatmul.bf16.gmra.mxu0 %v239
    %v535 = vpop.f32.mrf.mxu0
    %v536 = vadd.f32 %v513, %v535
    %v537 = vpop.f32.mrf.mxu0
    %v538 = vadd.f32 %v513, %v537
    %539 = vdwg.mxu0
    %v540 = vpack.c.bf16 %v536, %v536
    %v541 = vpack.c.bf16 %v538, %v538
    %v543 = vsel %vm327, %v470, 0
    %v546 = vsel %vm327, %v505, 0
    %548 = vmatpush.bf16.xpose.msra.mxu0 0
    %549 = vmatpush.bf16.xpose.msra.mxu0 0
    %550 = vmatpush.bf16.xpose.msra.mxu0 0
    %551 = vmatpush.bf16.xpose.msra.mxu0 0
    %552 = vmatpush.bf16.xpose.msra.mxu0 0
    %553 = vmatpush.bf16.xpose.msra.mxu0 0
    %554 = vmatpush.bf16.xpose.msra.mxu0 0
    %555 = vmatpush.bf16.xpose.msra.mxu0 %v546
    %556 = vmatmul.bf16.gmra.mxu0 %v543
    %v557 = vpop.f32.mrf.mxu0
    %v558 = vadd.f32 0.0, %v557
    %v559 = vpop.f32.mrf.mxu0
    %560 = vdwg.mxu0
    %v562 = vsel %vm327, %v471, 0
    %v565 = vsel %vm327, %v506, 0
    %567 = vmatpush.bf16.xpose.msra.mxu0 0
    %568 = vmatpush.bf16.xpose.msra.mxu0 0
    %569 = vmatpush.bf16.xpose.msra.mxu0 0
    %570 = vmatpush.bf16.xpose.msra.mxu0 0
    %571 = vmatpush.bf16.xpose.msra.mxu0 0
    %572 = vmatpush.bf16.xpose.msra.mxu0 0
    %573 = vmatpush.bf16.xpose.msra.mxu0 0
    %574 = vmatpush.bf16.xpose.msra.mxu0 %v565
    %575 = vmatmul.bf16.gmra.mxu0 %v562
    %v576 = vpop.f32.mrf.mxu0
    %v577 = vadd.f32 0.0, %v576
    %v578 = vpop.f32.mrf.mxu0
    %579 = vdwg.mxu0
    %v580 = vmul.f32 %v558, 0.25
    %v581 = vmul.f32 %v577, 0.25
    %v582 = vadd.f32 %v580, %v215
    %v583 = vadd.f32 %v581, %v216
    %v584 = vsel %vm370, %v582, -inf
    %585 = vmax.xlane.f32.xlu0 %v584
    %v586 = vpop.xlane.xlu0 %585
    %v587 = vsel %vm370, %v583, -inf
    %588 = vmax.xlane.f32.xlu0 %v587
    %v589 = vpop.xlane.xlu0 %588
    %v590 = vsub.f32 %v582, %v586
    %v591 = vsub.f32 %v583, %v589
    %v592 = vmul.f32 %v590, 1.442695
    %v593 = vpow.pop %v592
    %v594 = vmul.f32 %v591, 1.442695
    %v595 = vpow.pop %v594
    %v596 = vsel %vm370, %v593, 0.0
    %597 = vadd.xlane.f32.xlu0 %v596
    %v598 = vpop.xlane.xlu0 %597
    %v599 = vsel %vm370, %v595, 0.0
    %600 = vadd.xlane.f32.xlu0 %v599
    %v601 = vpop.xlane.xlu0 %600
    %v602 = vrcp.pop %v598
    %v603 = vrcp.pop %v601
    %v604 = vmul.f32 %v593, %v602
    %v605 = vmul.f32 %v595, %v603
    %v606 = vpack.c.bf16 %v604, %v604
    %v607 = vpack.c.bf16 %v605, %v605
    %v609 = vsel %vm370, %v606, 0
    %v612 = vsel %vm398, %v540, 0
    %614 = vmatpush.bf16.msra.mxu0 0
    %615 = vmatpush.bf16.msra.mxu0 0
    %616 = vmatpush.bf16.msra.mxu0 0
    %617 = vmatpush.bf16.msra.mxu0 0
    %618 = vmatpush.bf16.msra.mxu0 0
    %619 = vmatpush.bf16.msra.mxu0 0
    %620 = vmatpush.bf16.msra.mxu0 0
    %621 = vmatpush.bf16.msra.mxu0 %v612
    %622 = vmatmul.bf16.gmra.mxu0 %v609
    %v623 = vpop.f32.mrf.mxu0
    %v624 = vadd.f32 0.0, %v623
    %v625 = vpop.f32.mrf.mxu0
    %626 = vdwg.mxu0
    %v628 = vsel %vm370, %v607, 0
    %v631 = vsel %vm398, %v541, 0
    %633 = vmatpush.bf16.msra.mxu0 0
    %634 = vmatpush.bf16.msra.mxu0 0
    %635 = vmatpush.bf16.msra.mxu0 0
    %636 = vmatpush.bf16.msra.mxu0 0
    %637 = vmatpush.bf16.msra.mxu0 0
    %638 = vmatpush.bf16.msra.mxu0 0
    %639 = vmatpush.bf16.msra.mxu0 0
    %640 = vmatpush.bf16.msra.mxu0 %v631
    %641 = vmatmul.bf16.gmra.mxu0 %v628
    %v642 = vpop.f32.mrf.mxu0
    %v643 = vadd.f32 0.0, %v642
    %v644 = vpop.f32.mrf.mxu0
    %645 = vdwg.mxu0
    %v646 = vpack.c.bf16 %v643, %v624
    %s647 = scalar_lea.vmem %s4, 8
    %v648 = vld [vmem:[%s647] sm:$0xf]
    %v649 = vld [vmem:[%s647 + $0x4] sm:$0xf]
    %v652 = vunpack.c.l.b16 %v648
    %v653 = vunpack.c.l.b16 %v649
    %v654 = vpack.c.b16 %v653, %v652
    %v657 = vsel %vm327, %v646, 0
    %659 = vmatpush.bf16.msra.mxu0 0
    %660 = vmatpush.bf16.msra.mxu0 0
    %661 = vmatpush.bf16.msra.mxu0 0
    %662 = vmatpush.bf16.msra.mxu0 0
    %663 = vmatpush.bf16.msra.mxu0 0
    %664 = vmatpush.bf16.msra.mxu0 0
    %665 = vmatpush.bf16.msra.mxu0 0
    %666 = vmatpush.bf16.msra.mxu0 %v654
    %667 = vmatmul.bf16.gmra.mxu0 %v657
    %v668 = vpop.f32.mrf.mxu0
    %v669 = vadd.f32 0.0, %v668
    %v670 = vpop.f32.mrf.mxu0
    %v671 = vadd.f32 0.0, %v670
    %672 = vdwg.mxu0
    %v675 = vunpack.c.l.b16 %v435
    %v676 = vunpack.c.l.b16 %v436
    %v677 = vpack.c.b16 %v676, %v675
    %v680 = vsel %vm327, %v434, 0
    %682 = vmatpush.bf16.msra.mxu0 0
    %683 = vmatpush.bf16.msra.mxu0 0
    %684 = vmatpush.bf16.msra.mxu0 0
    %685 = vmatpush.bf16.msra.mxu0 0
    %686 = vmatpush.bf16.msra.mxu0 0
    %687 = vmatpush.bf16.msra.mxu0 0
    %688 = vmatpush.bf16.msra.mxu0 0
    %689 = vmatpush.bf16.msra.mxu0 %v677
    %690 = vmatmul.bf16.gmra.mxu0 %v680
    %v691 = vpop.f32.mrf.mxu0
    %v692 = vadd.f32 %v669, %v691
    %v693 = vpop.f32.mrf.mxu0
    %v694 = vadd.f32 %v671, %v693
    %695 = vdwg.mxu0
    %v696 = vld [vmem:[%s7 + $0x6] sm:$0x1]
    %v697 = vperm.slane %v696, 0
    %v698 = vadd.f32 %v692, %v697
    %v699 = vadd.f32 %v694, %v697
    %v700 = vadd.f32 %v208, %v698
    %v701 = vadd.f32 %v209, %v699
    %v702 = vld [vmem:[%s7 + $0x7] sm:$0x1]
    %v703 = vld [vmem:[%s7 + $0x8] sm:$0x1]
    %v704 = vsel %vm152, %v700, 0.0
    %705 = vadd.xlane.f32.xlu0 %v704
    %v706 = vpop.xlane.xlu0 %705
    %v707 = vsel %vm152, %v701, 0.0
    %708 = vadd.xlane.f32.xlu0 %v707
    %v709 = vpop.xlane.xlu0 %708
    %v710 = vmul.f32 %v706, %v165
    %v711 = vmul.f32 %v709, %v165
    %v712 = vsub.f32 %v700, %v710
    %v713 = vsub.f32 %v701, %v711
    %v714 = vmul.f32 %v712, %v712
    %v715 = vmul.f32 %v713, %v713
    %v716 = vsel %vm152, %v714, 0.0
    %717 = vadd.xlane.f32.xlu0 %v716
    %v718 = vpop.xlane.xlu0 %717
    %v719 = vsel %vm152, %v715, 0.0
    %720 = vadd.xlane.f32.xlu0 %v719
    %v721 = vpop.xlane.xlu0 %720
    %v722 = vmul.f32 %v718, %v165
    %v723 = vmul.f32 %v721, %v165
    %v724 = vadd.f32 %v722, 1e-12
    %v725 = vadd.f32 %v723, 1e-12
    %v726 = vrsqrt.pop %v724
    %v727 = vmul.f32 %v726, %v724
    %v728 = vmul.f32 %v727, %v726
    %v729 = vmul.f32 0.5, %v728
    %v730 = vsub.f32 1.5, %v729
    %v731 = vmul.f32 %v726, %v730
    %vm732 = vweird.f32 %v724
    %vm733 = vweird.f32 %v726
    %vm734 = vmor %vm732, %vm733
    %v735 = vsel %vm734, %v726, %v731
    %v736 = vrsqrt.pop %v725
    %v737 = vmul.f32 %v736, %v725
    %v738 = vmul.f32 %v737, %v736
    %v739 = vmul.f32 0.5, %v738
    %v740 = vsub.f32 1.5, %v739
    %v741 = vmul.f32 %v736, %v740
    %vm742 = vweird.f32 %v725
    %vm743 = vweird.f32 %v736
    %vm744 = vmor %vm742, %vm743
    %v745 = vsel %vm744, %v736, %v741
    %v746 = vmul.f32 %v712, %v735
    %v747 = vmul.f32 %v713, %v745
    %v748 = vperm.slane %v702, 0
    %v749 = vmul.f32 %v746, %v748
    %v750 = vmul.f32 %v747, %v748
    %v751 = vperm.slane %v703, 0
    %v752 = vadd.f32 %v749, %v751
    %v753 = vadd.f32 %v750, %v751
    %v754 = vpack.c.bf16 %v753, %v752
    %v755 = vld [vmem:[%s5] sm:$0xf]
    %v756 = vld [vmem:[%s5 + $0x4] sm:$0xf]
    %v757 = vld [vmem:[%s5 + $0x8] sm:$0xf]
    %v758 = vld [vmem:[%s5 + $0xc] sm:$0xf]
    %v759 = vld [vmem:[%s7 + $0x9] sm:$0x1]
    %v760 = vperm.slane %v759, 0
    %v765 = vunpack.c.l.b16 %v755
    %v766 = vunpack.c.l.b16 %v756
    %v767 = vunpack.c.l.b16 %v757
    %v768 = vunpack.c.l.b16 %v758
    %v769 = vpack.c.b16 %v766, %v765
    %v770 = vpack.c.b16 %v768, %v767
    %v774 = vsel %vm152, %v754, 0
    %776 = vmatpush.bf16.msra.mxu0 0
    %777 = vmatpush.bf16.msra.mxu0 0
    %778 = vmatpush.bf16.msra.mxu0 0
    %779 = vmatpush.bf16.msra.mxu0 0
    %780 = vmatpush.bf16.msra.mxu0 0
    %781 = vmatpush.bf16.msra.mxu0 0
    %782 = vmatpush.bf16.msra.mxu0 %v770
    %783 = vmatpush.bf16.msra.mxu0 %v769
    %784 = vmatmul.bf16.gmra.mxu0 %v774
    %v785 = vpop.f32.mrf.mxu0
    %v786 = vadd.f32 %v760, %v785
    %v787 = vpop.f32.mrf.mxu0
    %v788 = vadd.f32 %v760, %v787
    %789 = vdwg.mxu0
    %v790 = vmul.f32 %v786, %v786
    %v791 = vmul.f32 %v788, %v788
    %v792 = vmul.f32 %v786, %v790
    %v793 = vmul.f32 %v788, %v791
    %v794 = vmul.f32 %v792, 0.044715
    %v795 = vmul.f32 %v793, 0.044715
    %v796 = vadd.f32 %v786, %v794
    %v797 = vadd.f32 %v788, %v795
    %v798 = vmul.f32 %v796, 0.7978846
    %v799 = vmul.f32 %v797, 0.7978846
    %v800 = vtanh.pop %v798
    %v801 = vtanh.pop %v799
    %v802 = vadd.f32 %v800, 1.0
    %v803 = vadd.f32 %v801, 1.0
    %v804 = vmul.f32 %v802, 0.5
    %v805 = vmul.f32 %v803, 0.5
    %v806 = vmul.f32 %v786, %v804
    %v807 = vmul.f32 %v788, %v805
    %v808 = vpack.c.bf16 %v807, %v806
    %v809 = vld [vmem:[%s6] sm:$0xf]
    %v810 = vld [vmem:[%s6 + $0x4] sm:$0xf]
    %v811 = vld [vmem:[%s6 + $0x8] sm:$0xf]
    %v812 = vld [vmem:[%s6 + $0xc] sm:$0xf]
    %v813 = vld [vmem:[%s6 + $0x10] sm:$0xf]
    %v814 = vld [vmem:[%s6 + $0x14] sm:$0xf]
    %v815 = vld [vmem:[%s6 + $0x18] sm:$0xf]
    %v816 = vld [vmem:[%s6 + $0x1c] sm:$0xf]
    %v817 = vld [vmem:[%s7 + $0xa] sm:$0x1]
    %v818 = vperm.slane %v817, 0
    %v827 = vunpack.c.l.b16 %v809
    %v828 = vunpack.c.l.b16 %v810
    %v829 = vunpack.c.l.b16 %v811
    %v830 = vunpack.c.l.b16 %v812
    %v831 = vunpack.c.l.b16 %v813
    %v832 = vunpack.c.l.b16 %v814
    %v833 = vunpack.c.l.b16 %v815
    %v834 = vunpack.c.l.b16 %v816
    %v835 = vpack.c.b16 %v828, %v827
    %v836 = vpack.c.b16 %v830, %v829
    %v837 = vpack.c.b16 %v832, %v831
    %v838 = vpack.c.b16 %v834, %v833
    %vm843 = vcmask 523264
    %v845 = vsel %vm843, %v808, 0
    %847 = vmatpush.bf16.msra.mxu0 0
    %848 = vmatpush.bf16.msra.mxu0 0
    %849 = vmatpush.bf16.msra.mxu0 0
    %850 = vmatpush.bf16.msra.mxu0 0
    %851 = vmatpush.bf16.msra.mxu0 %v838
    %852 = vmatpush.bf16.msra.mxu0 %v837
    %853 = vmatpush.bf16.msra.mxu0 %v836
    %854 = vmatpush.bf16.msra.mxu0 %v835
    %855 = vmatmul.bf16.gmra.mxu0 %v845
    %v856 = vpop.f32.mrf.mxu0
    %v857 = vadd.f32 %v818, %v856
    %v858 = vpop.f32.mrf.mxu0
    %v859 = vadd.f32 %v818, %v858
    %860 = vdwg.mxu0
    %v861 = vadd.f32 %v752, %v857
    %v862 = vadd.f32 %v753, %v859
    %v863 = vld [vmem:[%s7 + $0xb] sm:$0x1]
    %v864 = vld [vmem:[%s7 + $0xc] sm:$0x1]
    %v865 = vsel %vm152, %v861, 0.0
    %866 = vadd.xlane.f32.xlu0 %v865
    %v867 = vpop.xlane.xlu0 %866
    %v868 = vsel %vm152, %v862, 0.0
    %869 = vadd.xlane.f32.xlu0 %v868
    %v870 = vpop.xlane.xlu0 %869
    %v871 = vmul.f32 %v867, %v165
    %v872 = vmul.f32 %v870, %v165
    %v873 = vsub.f32 %v861, %v871
    %v874 = vsub.f32 %v862, %v872
    %v875 = vmul.f32 %v873, %v873
    %v876 = vmul.f32 %v874, %v874
    %v877 = vsel %vm152, %v875, 0.0
    %878 = vadd.xlane.f32.xlu0 %v877
    %v879 = vpop.xlane.xlu0 %878
    %v880 = vsel %vm152, %v876, 0.0
    %881 = vadd.xlane.f32.xlu0 %v880
    %v882 = vpop.xlane.xlu0 %881
    %v883 = vmul.f32 %v879, %v165
    %v884 = vmul.f32 %v882, %v165
    %v885 = vadd.f32 %v883, 1e-12
    %v886 = vadd.f32 %v884, 1e-12
    %v887 = vrsqrt.pop %v885
    %v888 = vmul.f32 %v887, %v885
    %v889 = vmul.f32 %v888, %v887
    %v890 = vmul.f32 0.5, %v889
    %v891 = vsub.f32 1.5, %v890
    %v892 = vmul.f32 %v887, %v891
    %vm893 = vweird.f32 %v885
    %vm894 = vweird.f32 %v887
    %vm895 = vmor %vm893, %vm894
    %v896 = vsel %vm895, %v887, %v892
    %v897 = vrsqrt.pop %v886
    %v898 = vmul.f32 %v897, %v886
    %v899 = vmul.f32 %v898, %v897
    %v900 = vmul.f32 0.5, %v899
    %v901 = vsub.f32 1.5, %v900
    %v902 = vmul.f32 %v897, %v901
    %vm903 = vweird.f32 %v886
    %vm904 = vweird.f32 %v897
    %vm905 = vmor %vm903, %vm904
    %v906 = vsel %vm905, %v897, %v902
    %v907 = vmul.f32 %v873, %v896
    %v908 = vmul.f32 %v874, %v906
    %v909 = vperm.slane %v863, 0
    %v910 = vmul.f32 %v907, %v909
    %v911 = vmul.f32 %v908, %v909
    %v912 = vperm.slane %v864, 0
    %v913 = vadd.f32 %v910, %v912
    %v914 = vadd.f32 %v911, %v912
    %v915 = vpack.c.bf16 %v914, %v913
    %s916 = scalar_lea.vmem %s3, 96
    %v917 = vld [vmem:[%s916] sm:$0xf]
    %v918 = vld [vmem:[%s916 + $0x4] sm:$0xf]
    %v919 = vld [vmem:[%s916 + $0x8] sm:$0xf]
    %v920 = vld [vmem:[%s916 + $0xc] sm:$0xf]
    %s921 = scalar_lea.vmem %s7, 16
    %v922 = vld [vmem:[%s921] sm:$0x1]
    %v923 = vperm.slane %v922, 0
    %v928 = vunpack.c.l.b16 %v917
    %v929 = vunpack.c.l.b16 %v918
    %v930 = vunpack.c.l.b16 %v919
    %v931 = vunpack.c.l.b16 %v920
    %v932 = vpack.c.b16 %v929, %v928
    %v933 = vpack.c.b16 %v931, %v930
    %v937 = vsel %vm152, %v915, 0
    %939 = vmatpush.bf16.msra.mxu0 0
    %940 = vmatpush.bf16.msra.mxu0 0
    %941 = vmatpush.bf16.msra.mxu0 0
    %942 = vmatpush.bf16.msra.mxu0 0
    %943 = vmatpush.bf16.msra.mxu0 0
    %944 = vmatpush.bf16.msra.mxu0 0
    %945 = vmatpush.bf16.msra.mxu0 %v933
    %946 = vmatpush.bf16.msra.mxu0 %v932
    %947 = vmatmul.bf16.gmra.mxu0 %v937
    %v948 = vpop.f32.mrf.mxu0
    %v949 = vadd.f32 %v923, %v948
    %v950 = vpop.f32.mrf.mxu0
    %v951 = vadd.f32 %v923, %v950
    %952 = vdwg.mxu0
    %v953 = vpack.c.bf16 %v949, %v949
    %v954 = vpack.c.bf16 %v951, %v951
    %s955 = scalar_lea.vmem %s3, 112
    %v956 = vld [vmem:[%s955] sm:$0xf]
    %v957 = vld [vmem:[%s955 + $0x4] sm:$0xf]
    %v958 = vld [vmem:[%s955 + $0x8] sm:$0xf]
    %v959 = vld [vmem:[%s955 + $0xc] sm:$0xf]
    %v960 = vld [vmem:[%s921 + $0x1] sm:$0x1]
    %v961 = vperm.slane %v960, 0
    %v966 = vunpack.c.l.b16 %v956
    %v967 = vunpack.c.l.b16 %v957
    %v968 = vunpack.c.l.b16 %v958
    %v969 = vunpack.c.l.b16 %v959
    %v970 = vpack.c.b16 %v967, %v966
    %v971 = vpack.c.b16 %v969, %v968
    %974 = vmatpush.bf16.msra.mxu0 0
    %975 = vmatpush.bf16.msra.mxu0 0
    %976 = vmatpush.bf16.msra.mxu0 0
    %977 = vmatpush.bf16.msra.mxu0 0
    %978 = vmatpush.bf16.msra.mxu0 0
    %979 = vmatpush.bf16.msra.mxu0 0
    %980 = vmatpush.bf16.msra.mxu0 %v971
    %981 = vmatpush.bf16.msra.mxu0 %v970
    %982 = vmatmul.bf16.gmra.mxu0 %v937
    %v983 = vpop.f32.mrf.mxu0
    %v984 = vadd.f32 %v961, %v983
    %v985 = vpop.f32.mrf.mxu0
    %v986 = vadd.f32 %v961, %v985
    %987 = vdwg.mxu0
    %v988 = vpack.c.bf16 %v984, %v984
    %v989 = vpack.c.bf16 %v986, %v986
    %s990 = scalar_lea.vmem %s3, 128
    %v991 = vld [vmem:[%s990] sm:$0xf]
    %v992 = vld [vmem:[%s990 + $0x4] sm:$0xf]
    %v993 = vld [vmem:[%s990 + $0x8] sm:$0xf]
    %v994 = vld [vmem:[%s990 + $0xc] sm:$0xf]
    %v995 = vld [vmem:[%s921 + $0x2] sm:$0x1]
    %v996 = vperm.slane %v995, 0
    %v1001 = vunpack.c.l.b16 %v991
    %v1002 = vunpack.c.l.b16 %v992
    %v1003 = vunpack.c.l.b16 %v993
    %v1004 = vunpack.c.l.b16 %v994
    %v1005 = vpack.c.b16 %v1002, %v1001
    %v1006 = vpack.c.b16 %v1004, %v1003
    %1009 = vmatpush.bf16.msra.mxu0 0
    %1010 = vmatpush.bf16.msra.mxu0 0
    %1011 = vmatpush.bf16.msra.mxu0 0
    %1012 = vmatpush.bf16.msra.mxu0 0
    %1013 = vmatpush.bf16.msra.mxu0 0
    %1014 = vmatpush.bf16.msra.mxu0 0
    %1015 = vmatpush.bf16.msra.mxu0 %v1006
    %1016 = vmatpush.bf16.msra.mxu0 %v1005
    %1017 = vmatmul.bf16.gmra.mxu0 %v937
    %v1018 = vpop.f32.mrf.mxu0
    %v1019 = vadd.f32 %v996, %v1018
    %v1020 = vpop.f32.mrf.mxu0
    %v1021 = vadd.f32 %v996, %v1020
    %1022 = vdwg.mxu0
    %v1023 = vpack.c.bf16 %v1019, %v1019
    %v1024 = vpack.c.bf16 %v1021, %v1021
    %v1026 = vsel %vm327, %v953, 0
    %v1029 = vsel %vm327, %v988, 0
    %1031 = vmatpush.bf16.xpose.msra.mxu0 0
    %1032 = vmatpush.bf16.xpose.msra.mxu0 0
    %1033 = vmatpush.bf16.xpose.msra.mxu0 0
    %1034 = vmatpush.bf16.xpose.msra.mxu0 0
    %1035 = vmatpush.bf16.xpose.msra.mxu0 0
    %1036 = vmatpush.bf16.xpose.msra.mxu0 0
    %1037 = vmatpush.bf16.xpose.msra.mxu0 0
    %1038 = vmatpush.bf16.xpose.msra.mxu0 %v1029
    %1039 = vmatmul.bf16.gmra.mxu0 %v1026
    %v1040 = vpop.f32.mrf.mxu0
    %v1041 = vadd.f32 0.0, %v1040
    %v1042 = vpop.f32.mrf.mxu0
    %1043 = vdwg.mxu0
    %v1045 = vsel %vm327, %v954, 0
    %v1048 = vsel %vm327, %v989, 0
    %1050 = vmatpush.bf16.xpose.msra.mxu0 0
    %1051 = vmatpush.bf16.xpose.msra.mxu0 0
    %1052 = vmatpush.bf16.xpose.msra.mxu0 0
    %1053 = vmatpush.bf16.xpose.msra.mxu0 0
    %1054 = vmatpush.bf16.xpose.msra.mxu0 0
    %1055 = vmatpush.bf16.xpose.msra.mxu0 0
    %1056 = vmatpush.bf16.xpose.msra.mxu0 0
    %1057 = vmatpush.bf16.xpose.msra.mxu0 %v1048
    %1058 = vmatmul.bf16.gmra.mxu0 %v1045
    %v1059 = vpop.f32.mrf.mxu0
    %v1060 = vadd.f32 0.0, %v1059
    %v1061 = vpop.f32.mrf.mxu0
    %1062 = vdwg.mxu0
    %v1063 = vmul.f32 %v1041, 0.25
    %v1064 = vmul.f32 %v1060, 0.25
    %v1065 = vadd.f32 %v1063, %v215
    %v1066 = vadd.f32 %v1064, %v216
    %v1067 = vsel %vm370, %v1065, -inf
    %1068 = vmax.xlane.f32.xlu0 %v1067
    %v1069 = vpop.xlane.xlu0 %1068
    %v1070 = vsel %vm370, %v1066, -inf
    %1071 = vmax.xlane.f32.xlu0 %v1070
    %v1072 = vpop.xlane.xlu0 %1071
    %v1073 = vsub.f32 %v1065, %v1069
    %v1074 = vsub.f32 %v1066, %v1072
    %v1075 = vmul.f32 %v1073, 1.442695
    %v1076 = vpow.pop %v1075
    %v1077 = vmul.f32 %v1074, 1.442695
    %v1078 = vpow.pop %v1077
    %v1079 = vsel %vm370, %v1076, 0.0
    %1080 = vadd.xlane.f32.xlu0 %v1079
    %v1081 = vpop.xlane.xlu0 %1080
    %v1082 = vsel %vm370, %v1078, 0.0
    %1083 = vadd.xlane.f32.xlu0 %v1082
    %v1084 = vpop.xlane.xlu0 %1083
    %v1085 = vrcp.pop %v1081
    %v1086 = vrcp.pop %v1084
    %v1087 = vmul.f32 %v1076, %v1085
    %v1088 = vmul.f32 %v1078, %v1086
    %v1089 = vpack.c.bf16 %v1087, %v1087
    %v1090 = vpack.c.bf16 %v1088, %v1088
    %v1092 = vsel %vm370, %v1089, 0
    %v1095 = vsel %vm398, %v1023, 0
    %1097 = vmatpush.bf16.msra.mxu0 0
    %1098 = vmatpush.bf16.msra.mxu0 0
    %1099 = vmatpush.bf16.msra.mxu0 0
    %1100 = vmatpush.bf16.msra.mxu0 0
    %1101 = vmatpush.bf16.msra.mxu0 0
    %1102 = vmatpush.bf16.msra.mxu0 0
    %1103 = vmatpush.bf16.msra.mxu0 0
    %1104 = vmatpush.bf16.msra.mxu0 %v1095
    %1105 = vmatmul.bf16.gmra.mxu0 %v1092
    %v1106 = vpop.f32.mrf.mxu0
    %v1107 = vadd.f32 0.0, %v1106
    %v1108 = vpop.f32.mrf.mxu0
    %1109 = vdwg.mxu0
    %v1111 = vsel %vm370, %v1090, 0
    %v1114 = vsel %vm398, %v1024, 0
    %1116 = vmatpush.bf16.msra.mxu0 0
    %1117 = vmatpush.bf16.msra.mxu0 0
    %1118 = vmatpush.bf16.msra.mxu0 0
    %1119 = vmatpush.bf16.msra.mxu0 0
    %1120 = vmatpush.bf16.msra.mxu0 0
    %1121 = vmatpush.bf16.msra.mxu0 0
    %1122 = vmatpush.bf16.msra.mxu0 0
    %1123 = vmatpush.bf16.msra.mxu0 %v1114
    %1124 = vmatmul.bf16.gmra.mxu0 %v1111
    %v1125 = vpop.f32.mrf.mxu0
    %v1126 = vadd.f32 0.0, %v1125
    %v1127 = vpop.f32.mrf.mxu0
    %1128 = vdwg.mxu0
    %v1129 = vpack.c.bf16 %v1126, %v1107
    %s1130 = scalar_lea.vmem %s4, 16
    %v1131 = vld [vmem:[%s1130] sm:$0xf]
    %v1132 = vld [vmem:[%s1130 + $0x4] sm:$0xf]
    %s1133 = scalar_lea.vmem %s3, 144
    %v1134 = vld [vmem:[%s1133] sm:$0xf]
    %v1135 = vld [vmem:[%s1133 + $0x4] sm:$0xf]
    %v1136 = vld [vmem:[%s1133 + $0x8] sm:$0xf]
    %v1137 = vld [vmem:[%s1133 + $0xc] sm:$0xf]
    %v1138 = vld [vmem:[%s921 + $0x3] sm:$0x1]
    %v1139 = vperm.slane %v1138, 0
    %v1144 = vunpack.c.l.b16 %v1134
    %v1145 = vunpack.c.l.b16 %v1135
    %v1146 = vunpack.c.l.b16 %v1136
    %v1147 = vunpack.c.l.b16 %v1137
    %v1148 = vpack.c.b16 %v1145, %v1144
    %v1149 = vpack.c.b16 %v1147, %v1146
    %1152 = vmatpush.bf16.msra.mxu0 0
    %1153 = vmatpush.bf16.msra.mxu0 0
    %1154 = vmatpush.bf16.msra.mxu0 0
    %1155 = vmatpush.bf16.msra.mxu0 0
    %1156 = vmatpush.bf16.msra.mxu0 0
    %1157 = vmatpush.bf16.msra.mxu0 0
    %1158 = vmatpush.bf16.msra.mxu0 %v1149
    %1159 = vmatpush.bf16.msra.mxu0 %v1148
    %1160 = vmatmul.bf16.gmra.mxu0 %v937
    %v1161 = vpop.f32.mrf.mxu0
    %v1162 = vadd.f32 %v1139, %v1161
    %v1163 = vpop.f32.mrf.mxu0
    %v1164 = vadd.f32 %v1139, %v1163
    %1165 = vdwg.mxu0
    %v1166 = vpack.c.bf16 %v1162, %v1162
    %v1167 = vpack.c.bf16 %v1164, %v1164
    %s1168 = scalar_lea.vmem %s3, 160
    %v1169 = vld [vmem:[%s1168] sm:$0xf]
    %v1170 = vld [vmem:[%s1168 + $0x4] sm:$0xf]
    %v1171 = vld [vmem:[%s1168 + $0x8] sm:$0xf]
    %v1172 = vld [vmem:[%s1168 + $0xc] sm:$0xf]
    %v1173 = vld [vmem:[%s921 + $0x4] sm:$0x1]
    %v1174 = vperm.slane %v1173, 0
    %v1179 = vunpack.c.l.b16 %v1169
    %v1180 = vunpack.c.l.b16 %v1170
    %v1181 = vunpack.c.l.b16 %v1171
    %v1182 = vunpack.c.l.b16 %v1172
    %v1183 = vpack.c.b16 %v1180, %v1179
    %v1184 = vpack.c.b16 %v1182, %v1181
    %1187 = vmatpush.bf16.msra.mxu0 0
    %1188 = vmatpush.bf16.msra.mxu0 0
    %1189 = vmatpush.bf16.msra.mxu0 0
    %1190 = vmatpush.bf16.msra.mxu0 0
    %1191 = vmatpush.bf16.msra.mxu0 0
    %1192 = vmatpush.bf16.msra.mxu0 0
    %1193 = vmatpush.bf16.msra.mxu0 %v1184
    %1194 = vmatpush.bf16.msra.mxu0 %v1183
    %1195 = vmatmul.bf16.gmra.mxu0 %v937
    %v1196 = vpop.f32.mrf.mxu0
    %v1197 = vadd.f32 %v1174, %v1196
    %v1198 = vpop.f32.mrf.mxu0
    %v1199 = vadd.f32 %v1174, %v1198
    %1200 = vdwg.mxu0
    %v1201 = vpack.c.bf16 %v1197, %v1197
    %v1202 = vpack.c.bf16 %v1199, %v1199
    %s1203 = scalar_lea.vmem %s3, 176
    %v1204 = vld [vmem:[%s1203] sm:$0xf]
    %v1205 = vld [vmem:[%s1203 + $0x4] sm:$0xf]
    %v1206 = vld [vmem:[%s1203 + $0x8] sm:$0xf]
    %v1207 = vld [vmem:[%s1203 + $0xc] sm:$0xf]
    %v1208 = vld [vmem:[%s921 + $0x5] sm:$0x1]
    %v1209 = vperm.slane %v1208, 0
    %v1214 = vunpack.c.l.b16 %v1204
    %v1215 = vunpack.c.l.b16 %v1205
    %v1216 = vunpack.c.l.b16 %v1206
    %v1217 = vunpack.c.l.b16 %v1207
    %v1218 = vpack.c.b16 %v1215, %v1214
    %v1219 = vpack.c.b16 %v1217, %v1216
    %1222 = vmatpush.bf16.msra.mxu0 0
    %1223 = vmatpush.bf16.msra.mxu0 0
    %1224 = vmatpush.bf16.msra.mxu0 0
    %1225 = vmatpush.bf16.msra.mxu0 0
    %1226 = vmatpush.bf16.msra.mxu0 0
    %1227 = vmatpush.bf16.msra.mxu0 0
    %1228 = vmatpush.bf16.msra.mxu0 %v1219
    %1229 = vmatpush.bf16.msra.mxu0 %v1218
    %1230 = vmatmul.bf16.gmra.mxu0 %v937
    %v1231 = vpop.f32.mrf.mxu0
    %v1232 = vadd.f32 %v1209, %v1231
    %v1233 = vpop.f32.mrf.mxu0
    %v1234 = vadd.f32 %v1209, %v1233
    %1235 = vdwg.mxu0
    %v1236 = vpack.c.bf16 %v1232, %v1232
    %v1237 = vpack.c.bf16 %v1234, %v1234
    %v1239 = vsel %vm327, %v1166, 0
    %v1242 = vsel %vm327, %v1201, 0
    %1244 = vmatpush.bf16.xpose.msra.mxu0 0
    %1245 = vmatpush.bf16.xpose.msra.mxu0 0
    %1246 = vmatpush.bf16.xpose.msra.mxu0 0
    %1247 = vmatpush.bf16.xpose.msra.mxu0 0
    %1248 = vmatpush.bf16.xpose.msra.mxu0 0
    %1249 = vmatpush.bf16.xpose.msra.mxu0 0
    %1250 = vmatpush.bf16.xpose.msra.mxu0 0
    %1251 = vmatpush.bf16.xpose.msra.mxu0 %v1242
    %1252 = vmatmul.bf16.gmra.mxu0 %v1239
    %v1253 = vpop.f32.mrf.mxu0
    %v1254 = vadd.f32 0.0, %v1253
    %v1255 = vpop.f32.mrf.mxu0
    %1256 = vdwg.mxu0
    %v1258 = vsel %vm327, %v1167, 0
    %v1261 = vsel %vm327, %v1202, 0
    %1263 = vmatpush.bf16.xpose.msra.mxu0 0
    %1264 = vmatpush.bf16.xpose.msra.mxu0 0
    %1265 = vmatpush.bf16.xpose.msra.mxu0 0
    %1266 = vmatpush.bf16.xpose.msra.mxu0 0
    %1267 = vmatpush.bf16.xpose.msra.mxu0 0
    %1268 = vmatpush.bf16.xpose.msra.mxu0 0
    %1269 = vmatpush.bf16.xpose.msra.mxu0 0
    %1270 = vmatpush.bf16.xpose.msra.mxu0 %v1261
    %1271 = vmatmul.bf16.gmra.mxu0 %v1258
    %v1272 = vpop.f32.mrf.mxu0
    %v1273 = vadd.f32 0.0, %v1272
    %v1274 = vpop.f32.mrf.mxu0
    %1275 = vdwg.mxu0
    %v1276 = vmul.f32 %v1254, 0.25
    %v1277 = vmul.f32 %v1273, 0.25
    %v1278 = vadd.f32 %v1276, %v215
    %v1279 = vadd.f32 %v1277, %v216
    %v1280 = vsel %vm370, %v1278, -inf
    %1281 = vmax.xlane.f32.xlu0 %v1280
    %v1282 = vpop.xlane.xlu0 %1281
    %v1283 = vsel %vm370, %v1279, -inf
    %1284 = vmax.xlane.f32.xlu0 %v1283
    %v1285 = vpop.xlane.xlu0 %1284
    %v1286 = vsub.f32 %v1278, %v1282
    %v1287 = vsub.f32 %v1279, %v1285
    %v1288 = vmul.f32 %v1286, 1.442695
    %v1289 = vpow.pop %v1288
    %v1290 = vmul.f32 %v1287, 1.442695
    %v1291 = vpow.pop %v1290
    %v1292 = vsel %vm370, %v1289, 0.0
    %1293 = vadd.xlane.f32.xlu0 %v1292
    %v1294 = vpop.xlane.xlu0 %1293
    %v1295 = vsel %vm370, %v1291, 0.0
    %1296 = vadd.xlane.f32.xlu0 %v1295
    %v1297 = vpop.xlane.xlu0 %1296
    %v1298 = vrcp.pop %v1294
    %v1299 = vrcp.pop %v1297
    %v1300 = vmul.f32 %v1289, %v1298
    %v1301 = vmul.f32 %v1291, %v1299
    %v1302 = vpack.c.bf16 %v1300, %v1300
    %v1303 = vpack.c.bf16 %v1301, %v1301
    %v1305 = vsel %vm370, %v1302, 0
    %v1308 = vsel %vm398, %v1236, 0
    %1310 = vmatpush.bf16.msra.mxu0 0
    %1311 = vmatpush.bf16.msra.mxu0 0
    %1312 = vmatpush.bf16.msra.mxu0 0
    %1313 = vmatpush.bf16.msra.mxu0 0
    %1314 = vmatpush.bf16.msra.mxu0 0
    %1315 = vmatpush.bf16.msra.mxu0 0
    %1316 = vmatpush.bf16.msra.mxu0 0
    %1317 = vmatpush.bf16.msra.mxu0 %v1308
    %1318 = vmatmul.bf16.gmra.mxu0 %v1305
    %v1319 = vpop.f32.mrf.mxu0
    %v1320 = vadd.f32 0.0, %v1319
    %v1321 = vpop.f32.mrf.mxu0
    %1322 = vdwg.mxu0
    %v1324 = vsel %vm370, %v1303, 0
    %v1327 = vsel %vm398, %v1237, 0
    %1329 = vmatpush.bf16.msra.mxu0 0
    %1330 = vmatpush.bf16.msra.mxu0 0
    %1331 = vmatpush.bf16.msra.mxu0 0
    %1332 = vmatpush.bf16.msra.mxu0 0
    %1333 = vmatpush.bf16.msra.mxu0 0
    %1334 = vmatpush.bf16.msra.mxu0 0
    %1335 = vmatpush.bf16.msra.mxu0 0
    %1336 = vmatpush.bf16.msra.mxu0 %v1327
    %1337 = vmatmul.bf16.gmra.mxu0 %v1324
    %v1338 = vpop.f32.mrf.mxu0
    %v1339 = vadd.f32 0.0, %v1338
    %v1340 = vpop.f32.mrf.mxu0
    %1341 = vdwg.mxu0
    %v1342 = vpack.c.bf16 %v1339, %v1320
    %s1343 = scalar_lea.vmem %s4, 24
    %v1344 = vld [vmem:[%s1343] sm:$0xf]
    %v1345 = vld [vmem:[%s1343 + $0x4] sm:$0xf]
    %v1348 = vunpack.c.l.b16 %v1344
    %v1349 = vunpack.c.l.b16 %v1345
    %v1350 = vpack.c.b16 %v1349, %v1348
    %v1353 = vsel %vm327, %v1342, 0
    %1355 = vmatpush.bf16.msra.mxu0 0
    %1356 = vmatpush.bf16.msra.mxu0 0
    %1357 = vmatpush.bf16.msra.mxu0 0
    %1358 = vmatpush.bf16.msra.mxu0 0
    %1359 = vmatpush.bf16.msra.mxu0 0
    %1360 = vmatpush.bf16.msra.mxu0 0
    %1361 = vmatpush.bf16.msra.mxu0 0
    %1362 = vmatpush.bf16.msra.mxu0 %v1350
    %1363 = vmatmul.bf16.gmra.mxu0 %v1353
    %v1364 = vpop.f32.mrf.mxu0
    %v1365 = vadd.f32 0.0, %v1364
    %v1366 = vpop.f32.mrf.mxu0
    %v1367 = vadd.f32 0.0, %v1366
    %1368 = vdwg.mxu0
    %v1371 = vunpack.c.l.b16 %v1131
    %v1372 = vunpack.c.l.b16 %v1132
    %v1373 = vpack.c.b16 %v1372, %v1371
    %v1376 = vsel %vm327, %v1129, 0
    %1378 = vmatpush.bf16.msra.mxu0 0
    %1379 = vmatpush.bf16.msra.mxu0 0
    %1380 = vmatpush.bf16.msra.mxu0 0
    %1381 = vmatpush.bf16.msra.mxu0 0
    %1382 = vmatpush.bf16.msra.mxu0 0
    %1383 = vmatpush.bf16.msra.mxu0 0
    %1384 = vmatpush.bf16.msra.mxu0 0
    %1385 = vmatpush.bf16.msra.mxu0 %v1373
    %1386 = vmatmul.bf16.gmra.mxu0 %v1376
    %v1387 = vpop.f32.mrf.mxu0
    %v1388 = vadd.f32 %v1365, %v1387
    %v1389 = vpop.f32.mrf.mxu0
    %v1390 = vadd.f32 %v1367, %v1389
    %1391 = vdwg.mxu0
    %v1392 = vld [vmem:[%s921 + $0x6] sm:$0x1]
    %v1393 = vperm.slane %v1392, 0
    %v1394 = vadd.f32 %v1388, %v1393
    %v1395 = vadd.f32 %v1390, %v1393
    %v1396 = vadd.f32 %v913, %v1394
    %v1397 = vadd.f32 %v914, %v1395
    %v1398 = vld [vmem:[%s921 + $0x7] sm:$0x1]
    %v1399 = vld [vmem:[%s921 + $0x8] sm:$0x1]
    %v1400 = vsel %vm152, %v1396, 0.0
    %1401 = vadd.xlane.f32.xlu0 %v1400
    %v1402 = vpop.xlane.xlu0 %1401
    %v1403 = vsel %vm152, %v1397, 0.0
    %1404 = vadd.xlane.f32.xlu0 %v1403
    %v1405 = vpop.xlane.xlu0 %1404
    %v1406 = vmul.f32 %v1402, %v165
    %v1407 = vmul.f32 %v1405, %v165
    %v1408 = vsub.f32 %v1396, %v1406
    %v1409 = vsub.f32 %v1397, %v1407
    %v1410 = vmul.f32 %v1408, %v1408
    %v1411 = vmul.f32 %v1409, %v1409
    %v1412 = vsel %vm152, %v1410, 0.0
    %1413 = vadd.xlane.f32.xlu0 %v1412
    %v1414 = vpop.xlane.xlu0 %1413
    %v1415 = vsel %vm152, %v1411, 0.0
    %1416 = vadd.xlane.f32.xlu0 %v1415
    %v1417 = vpop.xlane.xlu0 %1416
    %v1418 = vmul.f32 %v1414, %v165
    %v1419 = vmul.f32 %v1417, %v165
    %v1420 = vadd.f32 %v1418, 1e-12
    %v1421 = vadd.f32 %v1419, 1e-12
    %v1422 = vrsqrt.pop %v1420
    %v1423 = vmul.f32 %v1422, %v1420
    %v1424 = vmul.f32 %v1423, %v1422
    %v1425 = vmul.f32 0.5, %v1424
    %v1426 = vsub.f32 1.5, %v1425
    %v1427 = vmul.f32 %v1422, %v1426
    %vm1428 = vweird.f32 %v1420
    %vm1429 = vweird.f32 %v1422
    %vm1430 = vmor %vm1428, %vm1429
    %v1431 = vsel %vm1430, %v1422, %v1427
    %v1432 = vrsqrt.pop %v1421
    %v1433 = vmul.f32 %v1432, %v1421
    %v1434 = vmul.f32 %v1433, %v1432
    %v1435 = vmul.f32 0.5, %v1434
    %v1436 = vsub.f32 1.5, %v1435
    %v1437 = vmul.f32 %v1432, %v1436
    %vm1438 = vweird.f32 %v1421
    %vm1439 = vweird.f32 %v1432
    %vm1440 = vmor %vm1438, %vm1439
    %v1441 = vsel %vm1440, %v1432, %v1437
    %v1442 = vmul.f32 %v1408, %v1431
    %v1443 = vmul.f32 %v1409, %v1441
    %v1444 = vperm.slane %v1398, 0
    %v1445 = vmul.f32 %v1442, %v1444
    %v1446 = vmul.f32 %v1443, %v1444
    %v1447 = vperm.slane %v1399, 0
    %v1448 = vadd.f32 %v1445, %v1447
    %v1449 = vadd.f32 %v1446, %v1447
    %v1450 = vpack.c.bf16 %v1449, %v1448
    %s1451 = scalar_lea.vmem %s5, 16
    %v1452 = vld [vmem:[%s1451] sm:$0xf]
    %v1453 = vld [vmem:[%s1451 + $0x4] sm:$0xf]
    %v1454 = vld [vmem:[%s1451 + $0x8] sm:$0xf]
    %v1455 = vld [vmem:[%s1451 + $0xc] sm:$0xf]
    %v1456 = vld [vmem:[%s921 + $0x9] sm:$0x1]
    %v1457 = vperm.slane %v1456, 0
    %v1462 = vunpack.c.l.b16 %v1452
    %v1463 = vunpack.c.l.b16 %v1453
    %v1464 = vunpack.c.l.b16 %v1454
    %v1465 = vunpack.c.l.b16 %v1455
    %v1466 = vpack.c.b16 %v1463, %v1462
    %v1467 = vpack.c.b16 %v1465, %v1464
    %v1471 = vsel %vm152, %v1450, 0
    %1473 = vmatpush.bf16.msra.mxu0 0
    %1474 = vmatpush.bf16.msra.mxu0 0
    %1475 = vmatpush.bf16.msra.mxu0 0
    %1476 = vmatpush.bf16.msra.mxu0 0
    %1477 = vmatpush.bf16.msra.mxu0 0
    %1478 = vmatpush.bf16.msra.mxu0 0
    %1479 = vmatpush.bf16.msra.mxu0 %v1467
    %1480 = vmatpush.bf16.msra.mxu0 %v1466
    %1481 = vmatmul.bf16.gmra.mxu0 %v1471
    %v1482 = vpop.f32.mrf.mxu0
    %v1483 = vadd.f32 %v1457, %v1482
    %v1484 = vpop.f32.mrf.mxu0
    %v1485 = vadd.f32 %v1457, %v1484
    %1486 = vdwg.mxu0
    %v1487 = vmul.f32 %v1483, %v1483
    %v1488 = vmul.f32 %v1485, %v1485
    %v1489 = vmul.f32 %v1483, %v1487
    %v1490 = vmul.f32 %v1485, %v1488
    %v1491 = vmul.f32 %v1489, 0.044715
    %v1492 = vmul.f32 %v1490, 0.044715
    %v1493 = vadd.f32 %v1483, %v1491
    %v1494 = vadd.f32 %v1485, %v1492
    %v1495 = vmul.f32 %v1493, 0.7978846
    %v1496 = vmul.f32 %v1494, 0.7978846
    %v1497 = vtanh.pop %v1495
    %v1498 = vtanh.pop %v1496
    %v1499 = vadd.f32 %v1497, 1.0
    %v1500 = vadd.f32 %v1498, 1.0
    %v1501 = vmul.f32 %v1499, 0.5
    %v1502 = vmul.f32 %v1500, 0.5
    %v1503 = vmul.f32 %v1483, %v1501
    %v1504 = vmul.f32 %v1485, %v1502
    %v1505 = vpack.c.bf16 %v1504, %v1503
    %s1506 = scalar_lea.vmem %s6, 32
    %v1507 = vld [vmem:[%s1506] sm:$0xf]
    %v1508 = vld [vmem:[%s1506 + $0x4] sm:$0xf]
    %v1509 = vld [vmem:[%s1506 + $0x8] sm:$0xf]
    %v1510 = vld [vmem:[%s1506 + $0xc] sm:$0xf]
    %v1511 = vld [vmem:[%s1506 + $0x10] sm:$0xf]
    %v1512 = vld [vmem:[%s1506 + $0x14] sm:$0xf]
    %v1513 = vld [vmem:[%s1506 + $0x18] sm:$0xf]
    %v1514 = vld [vmem:[%s1506 + $0x1c] sm:$0xf]
    %v1515 = vld [vmem:[%s921 + $0xa] sm:$0x1]
    %v1516 = vperm.slane %v1515, 0
    %v1525 = vunpack.c.l.b16 %v1507
    %v1526 = vunpack.c.l.b16 %v1508
    %v1527 = vunpack.c.l.b16 %v1509
    %v1528 = vunpack.c.l.b16 %v1510
    %v1529 = vunpack.c.l.b16 %v1511
    %v1530 = vunpack.c.l.b16 %v1512
    %v1531 = vunpack.c.l.b16 %v1513
    %v1532 = vunpack.c.l.b16 %v1514
    %v1533 = vpack.c.b16 %v1526, %v1525
    %v1534 = vpack.c.b16 %v1528, %v1527
    %v1535 = vpack.c.b16 %v1530, %v1529
    %v1536 = vpack.c.b16 %v1532, %v1531
    %v1542 = vsel %vm843, %v1505, 0
    %1544 = vmatpush.bf16.msra.mxu0 0
    %1545 = vmatpush.bf16.msra.mxu0 0
    %1546 = vmatpush.bf16.msra.mxu0 0
    %1547 = vmatpush.bf16.msra.mxu0 0
    %1548 = vmatpush.bf16.msra.mxu0 %v1536
    %1549 = vmatpush.bf16.msra.mxu0 %v1535
    %1550 = vmatpush.bf16.msra.mxu0 %v1534
    %1551 = vmatpush.bf16.msra.mxu0 %v1533
    %1552 = vmatmul.bf16.gmra.mxu0 %v1542
    %v1553 = vpop.f32.mrf.mxu0
    %v1554 = vadd.f32 %v1516, %v1553
    %v1555 = vpop.f32.mrf.mxu0
    %v1556 = vadd.f32 %v1516, %v1555
    %1557 = vdwg.mxu0
    %v1558 = vadd.f32 %v1448, %v1554
    %v1559 = vadd.f32 %v1449, %v1556
    %v1560 = vld [vmem:[%s921 + $0xb] sm:$0x1]
    %v1561 = vld [vmem:[%s921 + $0xc] sm:$0x1]
    %v1562 = vsel %vm152, %v1558, 0.0
    %1563 = vadd.xlane.f32.xlu0 %v1562
    %v1564 = vpop.xlane.xlu0 %1563
    %v1565 = vsel %vm152, %v1559, 0.0
    %1566 = vadd.xlane.f32.xlu0 %v1565
    %v1567 = vpop.xlane.xlu0 %1566
    %v1568 = vmul.f32 %v1564, %v165
    %v1569 = vmul.f32 %v1567, %v165
    %v1570 = vsub.f32 %v1558, %v1568
    %v1571 = vsub.f32 %v1559, %v1569
    %v1572 = vmul.f32 %v1570, %v1570
    %v1573 = vmul.f32 %v1571, %v1571
    %v1574 = vsel %vm152, %v1572, 0.0
    %1575 = vadd.xlane.f32.xlu0 %v1574
    %v1576 = vpop.xlane.xlu0 %1575
    %v1577 = vsel %vm152, %v1573, 0.0
    %1578 = vadd.xlane.f32.xlu0 %v1577
    %v1579 = vpop.xlane.xlu0 %1578
    %v1580 = vmul.f32 %v1576, %v165
    %v1581 = vmul.f32 %v1579, %v165
    %v1582 = vadd.f32 %v1580, 1e-12
    %v1583 = vadd.f32 %v1581, 1e-12
    %v1584 = vrsqrt.pop %v1582
    %v1585 = vmul.f32 %v1584, %v1582
    %v1586 = vmul.f32 %v1585, %v1584
    %v1587 = vmul.f32 0.5, %v1586
    %v1588 = vsub.f32 1.5, %v1587
    %v1589 = vmul.f32 %v1584, %v1588
    %vm1590 = vweird.f32 %v1582
    %vm1591 = vweird.f32 %v1584
    %vm1592 = vmor %vm1590, %vm1591
    %v1593 = vsel %vm1592, %v1584, %v1589
    %v1594 = vrsqrt.pop %v1583
    %v1595 = vmul.f32 %v1594, %v1583
    %v1596 = vmul.f32 %v1595, %v1594
    %v1597 = vmul.f32 0.5, %v1596
    %v1598 = vsub.f32 1.5, %v1597
    %v1599 = vmul.f32 %v1594, %v1598
    %vm1600 = vweird.f32 %v1583
    %vm1601 = vweird.f32 %v1594
    %vm1602 = vmor %vm1600, %vm1601
    %v1603 = vsel %vm1602, %v1594, %v1599
    %v1604 = vmul.f32 %v1570, %v1593
    %v1605 = vmul.f32 %v1571, %v1603
    %v1606 = vperm.slane %v1560, 0
    %v1607 = vmul.f32 %v1604, %v1606
    %v1608 = vmul.f32 %v1605, %v1606
    %v1609 = vperm.slane %v1561, 0
    %v1610 = vadd.f32 %v1607, %v1609
    %v1611 = vadd.f32 %v1608, %v1609
    %v1612 = vpack.c.bf16 %v1610, %v1610
    %v1613 = vpack.c.bf16 %v1611, %v1611
    %v1614 = vld [vmem:[%s9] sm:$0xf]
    %v1615 = vld [vmem:[%s9 + $0x4] sm:$0xf]
    %v1616 = vld [vmem:[%s9 + $0x8] sm:$0xf]
    %v1617 = vld [vmem:[%s9 + $0xc] sm:$0xf]
    %v1618 = vld [vmem:[%s8 + $0x2] sm:$0x1]
    %v1619 = vperm.slane %v1618, 0
    %v1622 = vunpack.c.l.b16 %v1612
    %v1623 = vunpack.c.l.b16 %v1613
    %v1624 = vrot.slane %v1623, 7
    %vm1625 = vcmask 1041409
    %v1626 = vsel %vm1625, %v1624, %v1622
    %v1627 = vpack.c.b16 %v1626, %v1626
    %v1632 = vunpack.c.l.b16 %v1614
    %v1633 = vunpack.c.l.b16 %v1615
    %v1634 = vunpack.c.l.b16 %v1616
    %v1635 = vunpack.c.l.b16 %v1617
    %v1636 = vpack.c.b16 %v1633, %v1632
    %v1637 = vpack.c.b16 %v1635, %v1634
    %v1641 = vsel %vm152, %v1627, 0
    %1643 = vmatpush.bf16.msra.mxu0 0
    %1644 = vmatpush.bf16.msra.mxu0 0
    %1645 = vmatpush.bf16.msra.mxu0 0
    %1646 = vmatpush.bf16.msra.mxu0 0
    %1647 = vmatpush.bf16.msra.mxu0 0
    %1648 = vmatpush.bf16.msra.mxu0 0
    %1649 = vmatpush.bf16.msra.mxu0 %v1637
    %1650 = vmatpush.bf16.msra.mxu0 %v1636
    %1651 = vmatmul.bf16.gmra.mxu0 %v1641
    %v1652 = vpop.f32.mrf.mxu0
    %v1653 = vadd.f32 %v1619, %v1652
    %v1654 = vpop.f32.mrf.mxu0
    %1655 = vdwg.mxu0
    %v1656 = vtanh.pop %v1653
    %v1657 = vpack.c.bf16 %v1656, %v1656
    %s1658 = scalar_lea.vmem %s9, 16
    %v1659 = vld [vmem:[%s1658] sm:$0xf]
    %v1660 = vld [vmem:[%s1658 + $0x4] sm:$0xf]
    %v1661 = vld [vmem:[%s1658 + $0x8] sm:$0xf]
    %v1662 = vld [vmem:[%s1658 + $0xc] sm:$0xf]
    %v1667 = vunpack.c.l.b16 %v1659
    %v1668 = vunpack.c.l.b16 %v1660
    %v1669 = vunpack.c.l.b16 %v1661
    %v1670 = vunpack.c.l.b16 %v1662
    %v1671 = vpack.c.b16 %v1668, %v1667
    %v1672 = vpack.c.b16 %v1670, %v1669
    %v1676 = vsel %vm152, %v1657, 0
    %1678 = vmatpush.bf16.msra.mxu0 0
    %1679 = vmatpush.bf16.msra.mxu0 0
    %1680 = vmatpush.bf16.msra.mxu0 0
    %1681 = vmatpush.bf16.msra.mxu0 0
    %1682 = vmatpush.bf16.msra.mxu0 0
    %1683 = vmatpush.bf16.msra.mxu0 0
    %1684 = vmatpush.bf16.msra.mxu0 %v1672
    %1685 = vmatpush.bf16.msra.mxu0 %v1671
    %1686 = vmatmul.bf16.gmra.mxu0 %v1676
    %v1687 = vpop.f32.mrf.mxu0
    %v1688 = vadd.f32 0.0, %v1687
    %v1689 = vpop.f32.mrf.mxu0
    %1690 = vdwg.mxu0
    %v1691 = vld [vmem:[%s8 + $0x3] sm:$0x1]
    %v1692 = vperm.slane %v1691, 0
    %v1693 = vadd.f32 %v1688, %v1692
    %vm1694 = vcmask 17408
    %1695 = vst.msk [vmem:[#allocation2] sm:$0x3] %vm1694, %v1693
    // Predicated region
    $region42: #{tpu_custom_call.1} parent=1 // pred_check
      _
    $region43: #{tpu_custom_call.1} parent=1 // pred_check_branch
      %1697 = sbr.rel (0) target = $region45
    $region44: #{tpu_custom_call.1} parent=1 // pred_region
      %1699 = vsyncadd [#allocation3], 0
      %s1701 = sshll.u32 [#allocation2], 4
      %s1702 = int_to_ptr.vmem [resolvable:$true] %s1701
      %s1703 = sshll.u32 %s10, 4
      %s1704 = int_to_ptr.hbm [resolvable:$true] %s1703
      %1706 = dma.vmem_to_hbm [thread:$0]  %s1702, 32, %s1704, [#allocation3]
    $region45: #{tpu_custom_call.1} parent=1 // pred_fallthru
      _
    // Predicated region
    $region46: #{tpu_custom_call.1} parent=1 // pred_check
      _
    $region47: #{tpu_custom_call.1} parent=1 // pred_check_branch
      %1708 = sbr.rel (0) target = $region49
    $region48: #{tpu_custom_call.1} parent=1 // pred_region
      %1710 = dma.done [#allocation3], 32
    $region49: #{tpu_custom_call.1} parent=1 // pred_fallthru
      _
    %1711 = vsyncpa [#allocation3], 1

</llo_original>
